<compile_context>
chip_gen: v6e
topology: v6e:2x2x1
jax: 0.10.0
libtpu: 0.0.40
codegen_flags: <defaults>
</compile_context>

<pallas_src>
import numpy as np
import jax
import jax.numpy as jnp
from jax import lax
from jax.experimental import pallas as pl
from jax.experimental.pallas import tpu as pltpu

# ---- shapes (small, synthetic) ------------------------------------------------
N, H, W = 2, 16, 16          # batch, spatial
CIN, COUT = 1, 4             # grayscale in, 4 conv channels out
K = 3                        # 3x3 conv, stride 1, padding 1 ("same")
HIDDEN = 32                  # fc1 / fc2 width
NUM_CLASSES = 2              # binary classification logits
HW = H * W                   # 256 = 2 x 128 lanes (lane-dense)
FLAT = COUT * HW             # 1024 flatten size (NCHW order: C*H*W)
PAD_OFF = HW // 2            # 128: lane-aligned interior offset, > max shift (17)

assert CIN == 1              # grayscale per the module docstring
# TODO(synk): for CIN > 1 the kernel would need an extra input-channel loop.

_VMEM_SPEC = pl.BlockSpec(memory_space=pltpu.MemorySpace.VMEM)


# ---- single fused kernel ------------------------------------------------------
def baseline_net_kernel(x_ref, coef_ref, bc_ref, w1_ref, b1_ref,
                        w2_ref, b2_ref, w3_ref, b3_ref, o_ref, pad_ref):
    # x_ref   : (N, HW)             flattened grayscale input (CIN == 1)
    # coef_ref: (K*K, COUT, 1, HW)  conv weight * border mask, per tap & channel
    # bc_ref  : (COUT, 1, 1)        conv bias
    # w1_ref  : (COUT, HW, HIDDEN)  fc1 weight, pre-transposed & split by channel
    # b1_ref  : (1, HIDDEN)
    # w2_ref  : (HIDDEN, HIDDEN),      b2_ref: (1, HIDDEN)
    # w3_ref  : (HIDDEN, NUM_CLASSES), b3_ref: (1, NUM_CLASSES)
    # o_ref   : (N, NUM_CLASSES)
    # pad_ref : (N, 2*HW) VMEM scratch holding a zero-padded copy of x
    n = x_ref.shape[0]

    # -- in-kernel zero padding: x sits lane-aligned at [PAD_OFF, PAD_OFF+HW) --
    pad_ref[...] = jnp.zeros_like(pad_ref)
    pad_ref[:, PAD_OFF:PAD_OFF + HW] = x_ref[...]

    # -- the 9 shifted views of the input (flat index p -> p + oi*W + oj).
    #    Out-of-image taps read zeros / wrapped neighbours; those positions are
    #    killed by the border masks already folded into coef_ref.
    shifted = []
    for k in range(K * K):
        oi, oj = k // K - 1, k % K - 1
        start = PAD_OFF + oi * W + oj
        shifted.append(pad_ref[:, start:start + HW])            # (N, HW)

    # -- conv + bias + ReLU fused channel-by-channel straight into fc1:
    #       h1 = sum_c relu(conv_c) @ W1_c   (== torch.flatten(NCHW) @ fc1.T)
    h1 = jnp.zeros((n, HIDDEN), jnp.float32)
    for c in range(COUT):
        acc = jnp.zeros((n, HW), jnp.float32)
        for k in range(K * K):
            acc = acc + shifted[k] * coef_ref[k, c]             # (N,HW) * (1,HW)
        conv_c = jnp.maximum(acc + bc_ref[c], 0.0)              # + bias, ReLU
        h1 = h1 + jnp.dot(conv_c, w1_ref[c],
                          preferred_element_type=jnp.float32)
    h1 = jnp.maximum(h1 + b1_ref[...], 0.0)
    h2 = jnp.maximum(jnp.dot(h1, w2_ref[...],
                             preferred_element_type=jnp.float32) + b2_ref[...], 0.0)
    out = jnp.dot(h2, w3_ref[...],
                  preferred_element_type=jnp.float32) + b3_ref[...]
    o_ref[...] = out.astype(o_ref.dtype)


# ---- one-time parameter preparation (hoisted out of the per-call path) --------
def _border_masks():
    """(K*K, HW) f32 validity masks for each of the 9 conv taps."""
    ii, jj = np.meshgrid(np.arange(H), np.arange(W), indexing="ij")
    ii, jj = ii.reshape(-1), jj.reshape(-1)          # flat index p = i*W + j
    masks = np.zeros((K * K, HW), np.float32)
    for k in range(K * K):
        oi, oj = k // K - 1, k % K - 1
        masks[k] = ((ii + oi >= 0) & (ii + oi < H) &
                    (jj + oj >= 0) & (jj + oj < W)).astype(np.float32)
    return masks


def prepare_params(params):
    """All transposes/reshapes + conv border masks happen once, here."""
    masks = jnp.asarray(_border_masks())                        # (9, HW)
    wc = params["conv1_w"].reshape(COUT, CIN * K * K)           # (COUT, 9)
    coef = wc.T[:, :, None, None] * masks[:, None, None, :]     # (9, COUT, 1, HW)
    return {
        "coef":   coef.astype(jnp.float32),
        "conv_b": params["conv1_b"].reshape(COUT, 1, 1),
        "w1":     params["fc1_w"].T.reshape(COUT, HW, HIDDEN),  # flat idx = c*HW + p
        "b1":     params["fc1_b"].reshape(1, HIDDEN),
        "w2":     params["fc2_w"].T,
        "b2":     params["fc2_b"].reshape(1, HIDDEN),
        "w3":     params["fc3_w"].T,
        "b3":     params["fc3_b"].reshape(1, NUM_CLASSES),
    }


@jax.jit
def baseline_net_forward(x_nchw, prepped):
    """Forward pass of BaselineNet. x_nchw: (N, CIN, H, W) float32."""
    n = x_nchw.shape[0]
    xf = x_nchw.reshape(n, CIN * H * W)        # contiguous NCHW flatten (free)
    return pl.pallas_call(
        baseline_net_kernel,
        out_shape=jax.ShapeDtypeStruct((n, NUM_CLASSES), jnp.float32),
        in_specs=[_VMEM_SPEC] * 9,
        out_specs=_VMEM_SPEC,
        scratch_shapes=[pltpu.VMEM((n, 2 * HW), jnp.float32)],
    )(xf, prepped["coef"], prepped["conv_b"], prepped["w1"], prepped["b1"],
      prepped["w2"], prepped["b2"], prepped["w3"], prepped["b3"])


# ---- pure-JAX reference matching the PyTorch forward semantics ----------------
def reference_forward(x_nchw, params):
    y = lax.conv_general_dilated(
        x_nchw, params["conv1_w"], window_strides=(1, 1), padding="SAME",
        dimension_numbers=("NCHW", "OIHW", "NCHW"))
    y = jnp.maximum(y + params["conv1_b"][None, :, None, None], 0.0)
    y = y.reshape(x_nchw.shape[0], -1)                          # torch.flatten(x, 1)
    y = jnp.maximum(y @ params["fc1_w"].T + params["fc1_b"], 0.0)
    y = jnp.maximum(y @ params["fc2_w"].T + params["fc2_b"], 0.0)
    y = y @ params["fc3_w"].T + params["fc3_b"]
    return y


def init_params(key):
    ks = jax.random.split(key, 8)
    s = 0.05
    return {
        # PyTorch conventions: conv weight (Cout, Cin, KH, KW); linear weight (out, in)
        "conv1_w": s * jax.random.normal(ks[0], (COUT, CIN, K, K), jnp.float32),
        "conv1_b": s * jax.random.normal(ks[1], (COUT,), jnp.float32),
        "fc1_w":   s * jax.random.normal(ks[2], (HIDDEN, FLAT), jnp.float32),
        "fc1_b":   s * jax.random.normal(ks[3], (HIDDEN,), jnp.float32),
        "fc2_w":   s * jax.random.normal(ks[4], (HIDDEN, HIDDEN), jnp.float32),
        "fc2_b":   s * jax.random.normal(ks[5], (HIDDEN,), jnp.float32),
        "fc3_w":   s * jax.random.normal(ks[6], (NUM_CLASSES, HIDDEN), jnp.float32),
        "fc3_b":   s * jax.random.normal(ks[7], (NUM_CLASSES,), jnp.float32),
        # TODO(synk): conv2 / pool1 / pool2 are declared in __init__ with no args
        # and never used in forward (forward overwrites self.pool1), so they are
        # intentionally omitted here.
    }


if __name__ == "__main__":
    key = jax.random.PRNGKey(0)
    k_x, k_p = jax.random.split(key)
    x = jax.random.normal(k_x, (N, CIN, H, W), jnp.float32)
    params = init_params(k_p)
    prepped = prepare_params(params)        # one-time prep, outside the hot path

    out = jax.block_until_ready(baseline_net_forward(x, prepped))
    ref = jax.block_until_ready(reference_forward(x, params))

    assert out.shape == (N, NUM_CLASSES), out.shape
    assert jnp.allclose(out, ref, atol=1e-4, rtol=1e-4), (out, ref)
    print("KERNEL_OK")
</pallas_src>

<mosaic_0001>
module attributes {stable_mosaic.version = 11 : i64} {
  func.func @baseline_net_kernel(%arg0: memref<2x256xf32, #tpu.memory_space<vmem>>, %arg1: memref<9x4x1x256xf32, #tpu.memory_space<vmem>>, %arg2: memref<4x1x1xf32, #tpu.memory_space<vmem>>, %arg3: memref<4x256x32xf32, #tpu.memory_space<vmem>>, %arg4: memref<1x32xf32, #tpu.memory_space<vmem>>, %arg5: memref<32x32xf32, #tpu.memory_space<vmem>>, %arg6: memref<1x32xf32, #tpu.memory_space<vmem>>, %arg7: memref<32x2xf32, #tpu.memory_space<vmem>>, %arg8: memref<1x2xf32, #tpu.memory_space<vmem>>, %arg9: memref<2x2xf32, #tpu.memory_space<vmem>>, %arg10: memref<2x512xf32, #tpu.memory_space<vmem>>) attributes {dimension_semantics = [], scalar_prefetch = 0 : i64, scratch_operands = 1 : i64, tpu.core_type = #tpu.core_type<tc>} {
    %cst = arith.constant 0.000000e+00 : f32
    %0 = vector.broadcast %cst : f32 to vector<2x512xf32>
    %c0 = arith.constant 0 : index
    %c0_0 = arith.constant 0 : index
    %1 = vector.load %arg10[%c0, %c0_0] : memref<2x512xf32, #tpu.memory_space<vmem>>, vector<2x512xf32>
    tpu.vector_store %arg10[%c0, %c0_0], %0 {strides = array<i32>} : memref<2x512xf32, #tpu.memory_space<vmem>>, vector<2x512xf32>,
    %c0_1 = arith.constant 0 : index
    %c0_2 = arith.constant 0 : index
    %2 = vector.load %arg0[%c0_1, %c0_2] : memref<2x256xf32, #tpu.memory_space<vmem>>, vector<2x256xf32>
    %c0_3 = arith.constant 0 : index
    %c128 = arith.constant 128 : index
    %3 = vector.load %arg10[%c0_3, %c128] : memref<2x512xf32, #tpu.memory_space<vmem>>, vector<2x256xf32>
    tpu.vector_store %arg10[%c0_3, %c128], %2 {strides = array<i32>} : memref<2x512xf32, #tpu.memory_space<vmem>>, vector<2x256xf32>,
    %c0_4 = arith.constant 0 : index
    %c111 = arith.constant 111 : index
    %4 = vector.load %arg10[%c0_4, %c111] : memref<2x512xf32, #tpu.memory_space<vmem>>, vector<2x256xf32>
    %c0_5 = arith.constant 0 : index
    %c112 = arith.constant 112 : index
    %5 = vector.load %arg10[%c0_5, %c112] : memref<2x512xf32, #tpu.memory_space<vmem>>, vector<2x256xf32>
    %c0_6 = arith.constant 0 : index
    %c113 = arith.constant 113 : index
    %6 = vector.load %arg10[%c0_6, %c113] : memref<2x512xf32, #tpu.memory_space<vmem>>, vector<2x256xf32>
    %c0_7 = arith.constant 0 : index
    %c127 = arith.constant 127 : index
    %7 = vector.load %arg10[%c0_7, %c127] : memref<2x512xf32, #tpu.memory_space<vmem>>, vector<2x256xf32>
    %c0_8 = arith.constant 0 : index
    %c128_9 = arith.constant 128 : index
    %8 = vector.load %arg10[%c0_8, %c128_9] : memref<2x512xf32, #tpu.memory_space<vmem>>, vector<2x256xf32>
    %c0_10 = arith.constant 0 : index
    %c129 = arith.constant 129 : index
    %9 = vector.load %arg10[%c0_10, %c129] : memref<2x512xf32, #tpu.memory_space<vmem>>, vector<2x256xf32>
    %c0_11 = arith.constant 0 : index
    %c143 = arith.constant 143 : index
    %10 = vector.load %arg10[%c0_11, %c143] : memref<2x512xf32, #tpu.memory_space<vmem>>, vector<2x256xf32>
    %c0_12 = arith.constant 0 : index
    %c144 = arith.constant 144 : index
    %11 = vector.load %arg10[%c0_12, %c144] : memref<2x512xf32, #tpu.memory_space<vmem>>, vector<2x256xf32>
    %c0_13 = arith.constant 0 : index
    %c145 = arith.constant 145 : index
    %12 = vector.load %arg10[%c0_13, %c145] : memref<2x512xf32, #tpu.memory_space<vmem>>, vector<2x256xf32>
    %cst_14 = arith.constant 0.000000e+00 : f32
    %13 = vector.broadcast %cst_14 : f32 to vector<2x32xf32>
    %cst_15 = arith.constant 0.000000e+00 : f32
    %14 = vector.broadcast %cst_15 : f32 to vector<2x256xf32>
    %c0_16 = arith.constant 0 : index
    %c0_17 = arith.constant 0 : index
    %c0_18 = arith.constant 0 : index
    %c0_19 = arith.constant 0 : index
    %15 = vector.load %arg1[%c0_16, %c0_17, %c0_18, %c0_19] : memref<9x4x1x256xf32, #tpu.memory_space<vmem>>, vector<1x1x1x256xf32>
    %16 = vector.shape_cast %15 : vector<1x1x1x256xf32> to vector<1x256xf32>
    %17 = vector.broadcast %16 : vector<1x256xf32> to vector<2x256xf32>
    %18 = arith.mulf %4, %17 : vector<2x256xf32>
    %19 = arith.addf %14, %18 : vector<2x256xf32>
    %c1 = arith.constant 1 : index
    %c0_20 = arith.constant 0 : index
    %c0_21 = arith.constant 0 : index
    %c0_22 = arith.constant 0 : index
    %20 = vector.load %arg1[%c1, %c0_20, %c0_21, %c0_22] : memref<9x4x1x256xf32, #tpu.memory_space<vmem>>, vector<1x1x1x256xf32>
    %21 = vector.shape_cast %20 : vector<1x1x1x256xf32> to vector<1x256xf32>
    %22 = vector.broadcast %21 : vector<1x256xf32> to vector<2x256xf32>
    %23 = arith.mulf %5, %22 : vector<2x256xf32>
    %24 = arith.addf %19, %23 : vector<2x256xf32>
    %c2 = arith.constant 2 : index
    %c0_23 = arith.constant 0 : index
    %c0_24 = arith.constant 0 : index
    %c0_25 = arith.constant 0 : index
    %25 = vector.load %arg1[%c2, %c0_23, %c0_24, %c0_25] : memref<9x4x1x256xf32, #tpu.memory_space<vmem>>, vector<1x1x1x256xf32>
    %26 = vector.shape_cast %25 : vector<1x1x1x256xf32> to vector<1x256xf32>
    %27 = vector.broadcast %26 : vector<1x256xf32> to vector<2x256xf32>
    %28 = arith.mulf %6, %27 : vector<2x256xf32>
    %29 = arith.addf %24, %28 : vector<2x256xf32>
    %c3 = arith.constant 3 : index
    %c0_26 = arith.constant 0 : index
    %c0_27 = arith.constant 0 : index
    %c0_28 = arith.constant 0 : index
    %30 = vector.load %arg1[%c3, %c0_26, %c0_27, %c0_28] : memref<9x4x1x256xf32, #tpu.memory_space<vmem>>, vector<1x1x1x256xf32>
    %31 = vector.shape_cast %30 : vector<1x1x1x256xf32> to vector<1x256xf32>
    %32 = vector.broadcast %31 : vector<1x256xf32> to vector<2x256xf32>
    %33 = arith.mulf %7, %32 : vector<2x256xf32>
    %34 = arith.addf %29, %33 : vector<2x256xf32>
    %c4 = arith.constant 4 : index
    %c0_29 = arith.constant 0 : index
    %c0_30 = arith.constant 0 : index
    %c0_31 = arith.constant 0 : index
    %35 = vector.load %arg1[%c4, %c0_29, %c0_30, %c0_31] : memref<9x4x1x256xf32, #tpu.memory_space<vmem>>, vector<1x1x1x256xf32>
    %36 = vector.shape_cast %35 : vector<1x1x1x256xf32> to vector<1x256xf32>
    %37 = vector.broadcast %36 : vector<1x256xf32> to vector<2x256xf32>
    %38 = arith.mulf %8, %37 : vector<2x256xf32>
    %39 = arith.addf %34, %38 : vector<2x256xf32>
    %c5 = arith.constant 5 : index
    %c0_32 = arith.constant 0 : index
    %c0_33 = arith.constant 0 : index
    %c0_34 = arith.constant 0 : index
    %40 = vector.load %arg1[%c5, %c0_32, %c0_33, %c0_34] : memref<9x4x1x256xf32, #tpu.memory_space<vmem>>, vector<1x1x1x256xf32>
    %41 = vector.shape_cast %40 : vector<1x1x1x256xf32> to vector<1x256xf32>
    %42 = vector.broadcast %41 : vector<1x256xf32> to vector<2x256xf32>
    %43 = arith.mulf %9, %42 : vector<2x256xf32>
    %44 = arith.addf %39, %43 : vector<2x256xf32>
    %c6 = arith.constant 6 : index
    %c0_35 = arith.constant 0 : index
    %c0_36 = arith.constant 0 : index
    %c0_37 = arith.constant 0 : index
    %45 = vector.load %arg1[%c6, %c0_35, %c0_36, %c0_37] : memref<9x4x1x256xf32, #tpu.memory_space<vmem>>, vector<1x1x1x256xf32>
    %46 = vector.shape_cast %45 : vector<1x1x1x256xf32> to vector<1x256xf32>
    %47 = vector.broadcast %46 : vector<1x256xf32> to vector<2x256xf32>
    %48 = arith.mulf %10, %47 : vector<2x256xf32>
    %49 = arith.addf %44, %48 : vector<2x256xf32>
    %c7 = arith.constant 7 : index
    %c0_38 = arith.constant 0 : index
    %c0_39 = arith.constant 0 : index
    %c0_40 = arith.constant 0 : index
    %50 = vector.load %arg1[%c7, %c0_38, %c0_39, %c0_40] : memref<9x4x1x256xf32, #tpu.memory_space<vmem>>, vector<1x1x1x256xf32>
    %51 = vector.shape_cast %50 : vector<1x1x1x256xf32> to vector<1x256xf32>
    %52 = vector.broadcast %51 : vector<1x256xf32> to vector<2x256xf32>
    %53 = arith.mulf %11, %52 : vector<2x256xf32>
    %54 = arith.addf %49, %53 : vector<2x256xf32>
    %c8 = arith.constant 8 : index
    %c0_41 = arith.constant 0 : index
    %c0_42 = arith.constant 0 : index
    %c0_43 = arith.constant 0 : index
    %55 = vector.load %arg1[%c8, %c0_41, %c0_42, %c0_43] : memref<9x4x1x256xf32, #tpu.memory_space<vmem>>, vector<1x1x1x256xf32>
    %56 = vector.shape_cast %55 : vector<1x1x1x256xf32> to vector<1x256xf32>
    %57 = vector.broadcast %56 : vector<1x256xf32> to vector<2x256xf32>
    %58 = arith.mulf %12, %57 : vector<2x256xf32>
    %59 = arith.addf %54, %58 : vector<2x256xf32>
    %c0_44 = arith.constant 0 : index
    %c0_45 = arith.constant 0 : index
    %c0_46 = arith.constant 0 : index
    %60 = vector.load %arg2[%c0_44, %c0_45, %c0_46] : memref<4x1x1xf32, #tpu.memory_space<vmem>>, vector<1x1x1xf32>
    %61 = vector.shape_cast %60 : vector<1x1x1xf32> to vector<1x1xf32>
    %62 = vector.broadcast %61 : vector<1x1xf32> to vector<2x256xf32>
    %63 = arith.addf %59, %62 : vector<2x256xf32>
    %cst_47 = arith.constant 0.000000e+00 : f32
    %64 = vector.broadcast %cst_47 : f32 to vector<2x256xf32>
    %65 = arith.maximumf %63, %64 : vector<2x256xf32>
    %c0_48 = arith.constant 0 : index
    %c0_49 = arith.constant 0 : index
    %c0_50 = arith.constant 0 : index
    %66 = vector.load %arg3[%c0_48, %c0_49, %c0_50] : memref<4x256x32xf32, #tpu.memory_space<vmem>>, vector<1x256x32xf32>
    %67 = vector.shape_cast %66 : vector<1x256x32xf32> to vector<256x32xf32>
    %cst_51 = arith.constant dense<0.000000e+00> : vector<2x32xf32>
    %68 = tpu.matmul %65, %67, %cst_51 {dimension_numbers = #tpu.dot_dimension_numbers<[1], [0], [0], [1], [0, 0, 1, 1], [], []>} : vector<2x256xf32>, vector<256x32xf32>, vector<2x32xf32> -> vector<2x32xf32>
    %69 = arith.addf %13, %68 : vector<2x32xf32>
    %cst_52 = arith.constant 0.000000e+00 : f32
    %70 = vector.broadcast %cst_52 : f32 to vector<2x256xf32>
    %c0_53 = arith.constant 0 : index
    %c1_54 = arith.constant 1 : index
    %c0_55 = arith.constant 0 : index
    %c0_56 = arith.constant 0 : index
    %71 = vector.load %arg1[%c0_53, %c1_54, %c0_55, %c0_56] : memref<9x4x1x256xf32, #tpu.memory_space<vmem>>, vector<1x1x1x256xf32>
    %72 = vector.shape_cast %71 : vector<1x1x1x256xf32> to vector<1x256xf32>
    %73 = vector.broadcast %72 : vector<1x256xf32> to vector<2x256xf32>
    %74 = arith.mulf %4, %73 : vector<2x256xf32>
    %75 = arith.addf %70, %74 : vector<2x256xf32>
    %c1_57 = arith.constant 1 : index
    %c1_58 = arith.constant 1 : index
    %c0_59 = arith.constant 0 : index
    %c0_60 = arith.constant 0 : index
    %76 = vector.load %arg1[%c1_57, %c1_58, %c0_59, %c0_60] : memref<9x4x1x256xf32, #tpu.memory_space<vmem>>, vector<1x1x1x256xf32>
    %77 = vector.shape_cast %76 : vector<1x1x1x256xf32> to vector<1x256xf32>
    %78 = vector.broadcast %77 : vector<1x256xf32> to vector<2x256xf32>
    %79 = arith.mulf %5, %78 : vector<2x256xf32>
    %80 = arith.addf %75, %79 : vector<2x256xf32>
    %c2_61 = arith.constant 2 : index
    %c1_62 = arith.constant 1 : index
    %c0_63 = arith.constant 0 : index
    %c0_64 = arith.constant 0 : index
    %81 = vector.load %arg1[%c2_61, %c1_62, %c0_63, %c0_64] : memref<9x4x1x256xf32, #tpu.memory_space<vmem>>, vector<1x1x1x256xf32>
    %82 = vector.shape_cast %81 : vector<1x1x1x256xf32> to vector<1x256xf32>
    %83 = vector.broadcast %82 : vector<1x256xf32> to vector<2x256xf32>
    %84 = arith.mulf %6, %83 : vector<2x256xf32>
    %85 = arith.addf %80, %84 : vector<2x256xf32>
    %c3_65 = arith.constant 3 : index
    %c1_66 = arith.constant 1 : index
    %c0_67 = arith.constant 0 : index
    %c0_68 = arith.constant 0 : index
    %86 = vector.load %arg1[%c3_65, %c1_66, %c0_67, %c0_68] : memref<9x4x1x256xf32, #tpu.memory_space<vmem>>, vector<1x1x1x256xf32>
    %87 = vector.shape_cast %86 : vector<1x1x1x256xf32> to vector<1x256xf32>
    %88 = vector.broadcast %87 : vector<1x256xf32> to vector<2x256xf32>
    %89 = arith.mulf %7, %88 : vector<2x256xf32>
    %90 = arith.addf %85, %89 : vector<2x256xf32>
    %c4_69 = arith.constant 4 : index
    %c1_70 = arith.constant 1 : index
    %c0_71 = arith.constant 0 : index
    %c0_72 = arith.constant 0 : index
    %91 = vector.load %arg1[%c4_69, %c1_70, %c0_71, %c0_72] : memref<9x4x1x256xf32, #tpu.memory_space<vmem>>, vector<1x1x1x256xf32>
    %92 = vector.shape_cast %91 : vector<1x1x1x256xf32> to vector<1x256xf32>
    %93 = vector.broadcast %92 : vector<1x256xf32> to vector<2x256xf32>
    %94 = arith.mulf %8, %93 : vector<2x256xf32>
    %95 = arith.addf %90, %94 : vector<2x256xf32>
    %c5_73 = arith.constant 5 : index
    %c1_74 = arith.constant 1 : index
    %c0_75 = arith.constant 0 : index
    %c0_76 = arith.constant 0 : index
    %96 = vector.load %arg1[%c5_73, %c1_74, %c0_75, %c0_76] : memref<9x4x1x256xf32, #tpu.memory_space<vmem>>, vector<1x1x1x256xf32>
    %97 = vector.shape_cast %96 : vector<1x1x1x256xf32> to vector<1x256xf32>
    %98 = vector.broadcast %97 : vector<1x256xf32> to vector<2x256xf32>
    %99 = arith.mulf %9, %98 : vector<2x256xf32>
    %100 = arith.addf %95, %99 : vector<2x256xf32>
    %c6_77 = arith.constant 6 : index
    %c1_78 = arith.constant 1 : index
    %c0_79 = arith.constant 0 : index
    %c0_80 = arith.constant 0 : index
    %101 = vector.load %arg1[%c6_77, %c1_78, %c0_79, %c0_80] : memref<9x4x1x256xf32, #tpu.memory_space<vmem>>, vector<1x1x1x256xf32>
    %102 = vector.shape_cast %101 : vector<1x1x1x256xf32> to vector<1x256xf32>
    %103 = vector.broadcast %102 : vector<1x256xf32> to vector<2x256xf32>
    %104 = arith.mulf %10, %103 : vector<2x256xf32>
    %105 = arith.addf %100, %104 : vector<2x256xf32>
    %c7_81 = arith.constant 7 : index
    %c1_82 = arith.constant 1 : index
    %c0_83 = arith.constant 0 : index
    %c0_84 = arith.constant 0 : index
    %106 = vector.load %arg1[%c7_81, %c1_82, %c0_83, %c0_84] : memref<9x4x1x256xf32, #tpu.memory_space<vmem>>, vector<1x1x1x256xf32>
    %107 = vector.shape_cast %106 : vector<1x1x1x256xf32> to vector<1x256xf32>
    %108 = vector.broadcast %107 : vector<1x256xf32> to vector<2x256xf32>
    %109 = arith.mulf %11, %108 : vector<2x256xf32>
    %110 = arith.addf %105, %109 : vector<2x256xf32>
    %c8_85 = arith.constant 8 : index
    %c1_86 = arith.constant 1 : index
    %c0_87 = arith.constant 0 : index
    %c0_88 = arith.constant 0 : index
    %111 = vector.load %arg1[%c8_85, %c1_86, %c0_87, %c0_88] : memref<9x4x1x256xf32, #tpu.memory_space<vmem>>, vector<1x1x1x256xf32>
    %112 = vector.shape_cast %111 : vector<1x1x1x256xf32> to vector<1x256xf32>
    %113 = vector.broadcast %112 : vector<1x256xf32> to vector<2x256xf32>
    %114 = arith.mulf %12, %113 : vector<2x256xf32>
    %115 = arith.addf %110, %114 : vector<2x256xf32>
    %c1_89 = arith.constant 1 : index
    %c0_90 = arith.constant 0 : index
    %c0_91 = arith.constant 0 : index
    %116 = vector.load %arg2[%c1_89, %c0_90, %c0_91] : memref<4x1x1xf32, #tpu.memory_space<vmem>>, vector<1x1x1xf32>
    %117 = vector.shape_cast %116 : vector<1x1x1xf32> to vector<1x1xf32>
    %118 = vector.broadcast %117 : vector<1x1xf32> to vector<2x256xf32>
    %119 = arith.addf %115, %118 : vector<2x256xf32>
    %cst_92 = arith.constant 0.000000e+00 : f32
    %120 = vector.broadcast %cst_92 : f32 to vector<2x256xf32>
    %121 = arith.maximumf %119, %120 : vector<2x256xf32>
    %c1_93 = arith.constant 1 : index
    %c0_94 = arith.constant 0 : index
    %c0_95 = arith.constant 0 : index
    %122 = vector.load %arg3[%c1_93, %c0_94, %c0_95] : memref<4x256x32xf32, #tpu.memory_space<vmem>>, vector<1x256x32xf32>
    %123 = vector.shape_cast %122 : vector<1x256x32xf32> to vector<256x32xf32>
    %cst_96 = arith.constant dense<0.000000e+00> : vector<2x32xf32>
    %124 = tpu.matmul %121, %123, %cst_96 {dimension_numbers = #tpu.dot_dimension_numbers<[1], [0], [0], [1], [0, 0, 1, 1], [], []>} : vector<2x256xf32>, vector<256x32xf32>, vector<2x32xf32> -> vector<2x32xf32>
    %125 = arith.addf %69, %124 : vector<2x32xf32>
    %cst_97 = arith.constant 0.000000e+00 : f32
    %126 = vector.broadcast %cst_97 : f32 to vector<2x256xf32>
    %c0_98 = arith.constant 0 : index
    %c2_99 = arith.constant 2 : index
    %c0_100 = arith.constant 0 : index
    %c0_101 = arith.constant 0 : index
    %127 = vector.load %arg1[%c0_98, %c2_99, %c0_100, %c0_101] : memref<9x4x1x256xf32, #tpu.memory_space<vmem>>, vector<1x1x1x256xf32>
    %128 = vector.shape_cast %127 : vector<1x1x1x256xf32> to vector<1x256xf32>
    %129 = vector.broadcast %128 : vector<1x256xf32> to vector<2x256xf32>
    %130 = arith.mulf %4, %129 : vector<2x256xf32>
    %131 = arith.addf %126, %130 : vector<2x256xf32>
    %c1_102 = arith.constant 1 : index
    %c2_103 = arith.constant 2 : index
    %c0_104 = arith.constant 0 : index
    %c0_105 = arith.constant 0 : index
    %132 = vector.load %arg1[%c1_102, %c2_103, %c0_104, %c0_105] : memref<9x4x1x256xf32, #tpu.memory_space<vmem>>, vector<1x1x1x256xf32>
    %133 = vector.shape_cast %132 : vector<1x1x1x256xf32> to vector<1x256xf32>
    %134 = vector.broadcast %133 : vector<1x256xf32> to vector<2x256xf32>
    %135 = arith.mulf %5, %134 : vector<2x256xf32>
    %136 = arith.addf %131, %135 : vector<2x256xf32>
    %c2_106 = arith.constant 2 : index
    %c2_107 = arith.constant 2 : index
    %c0_108 = arith.constant 0 : index
    %c0_109 = arith.constant 0 : index
    %137 = vector.load %arg1[%c2_106, %c2_107, %c0_108, %c0_109] : memref<9x4x1x256xf32, #tpu.memory_space<vmem>>, vector<1x1x1x256xf32>
    %138 = vector.shape_cast %137 : vector<1x1x1x256xf32> to vector<1x256xf32>
    %139 = vector.broadcast %138 : vector<1x256xf32> to vector<2x256xf32>
    %140 = arith.mulf %6, %139 : vector<2x256xf32>
    %141 = arith.addf %136, %140 : vector<2x256xf32>
    %c3_110 = arith.constant 3 : index
    %c2_111 = arith.constant 2 : index
    %c0_112 = arith.constant 0 : index
    %c0_113 = arith.constant 0 : index
    %142 = vector.load %arg1[%c3_110, %c2_111, %c0_112, %c0_113] : memref<9x4x1x256xf32, #tpu.memory_space<vmem>>, vector<1x1x1x256xf32>
    %143 = vector.shape_cast %142 : vector<1x1x1x256xf32> to vector<1x256xf32>
    %144 = vector.broadcast %143 : vector<1x256xf32> to vector<2x256xf32>
    %145 = arith.mulf %7, %144 : vector<2x256xf32>
    %146 = arith.addf %141, %145 : vector<2x256xf32>
    %c4_114 = arith.constant 4 : index
    %c2_115 = arith.constant 2 : index
    %c0_116 = arith.constant 0 : index
    %c0_117 = arith.constant 0 : index
    %147 = vector.load %arg1[%c4_114, %c2_115, %c0_116, %c0_117] : memref<9x4x1x256xf32, #tpu.memory_space<vmem>>, vector<1x1x1x256xf32>
    %148 = vector.shape_cast %147 : vector<1x1x1x256xf32> to vector<1x256xf32>
    %149 = vector.broadcast %148 : vector<1x256xf32> to vector<2x256xf32>
    %150 = arith.mulf %8, %149 : vector<2x256xf32>
    %151 = arith.addf %146, %150 : vector<2x256xf32>
    %c5_118 = arith.constant 5 : index
    %c2_119 = arith.constant 2 : index
    %c0_120 = arith.constant 0 : index
    %c0_121 = arith.constant 0 : index
    %152 = vector.load %arg1[%c5_118, %c2_119, %c0_120, %c0_121] : memref<9x4x1x256xf32, #tpu.memory_space<vmem>>, vector<1x1x1x256xf32>
    %153 = vector.shape_cast %152 : vector<1x1x1x256xf32> to vector<1x256xf32>
    %154 = vector.broadcast %153 : vector<1x256xf32> to vector<2x256xf32>
    %155 = arith.mulf %9, %154 : vector<2x256xf32>
    %156 = arith.addf %151, %155 : vector<2x256xf32>
    %c6_122 = arith.constant 6 : index
    %c2_123 = arith.constant 2 : index
    %c0_124 = arith.constant 0 : index
    %c0_125 = arith.constant 0 : index
    %157 = vector.load %arg1[%c6_122, %c2_123, %c0_124, %c0_125] : memref<9x4x1x256xf32, #tpu.memory_space<vmem>>, vector<1x1x1x256xf32>
    %158 = vector.shape_cast %157 : vector<1x1x1x256xf32> to vector<1x256xf32>
    %159 = vector.broadcast %158 : vector<1x256xf32> to vector<2x256xf32>
    %160 = arith.mulf %10, %159 : vector<2x256xf32>
    %161 = arith.addf %156, %160 : vector<2x256xf32>
    %c7_126 = arith.constant 7 : index
    %c2_127 = arith.constant 2 : index
    %c0_128 = arith.constant 0 : index
    %c0_129 = arith.constant 0 : index
    %162 = vector.load %arg1[%c7_126, %c2_127, %c0_128, %c0_129] : memref<9x4x1x256xf32, #tpu.memory_space<vmem>>, vector<1x1x1x256xf32>
    %163 = vector.shape_cast %162 : vector<1x1x1x256xf32> to vector<1x256xf32>
    %164 = vector.broadcast %163 : vector<1x256xf32> to vector<2x256xf32>
    %165 = arith.mulf %11, %164 : vector<2x256xf32>
    %166 = arith.addf %161, %165 : vector<2x256xf32>
    %c8_130 = arith.constant 8 : index
    %c2_131 = arith.constant 2 : index
    %c0_132 = arith.constant 0 : index
    %c0_133 = arith.constant 0 : index
    %167 = vector.load %arg1[%c8_130, %c2_131, %c0_132, %c0_133] : memref<9x4x1x256xf32, #tpu.memory_space<vmem>>, vector<1x1x1x256xf32>
    %168 = vector.shape_cast %167 : vector<1x1x1x256xf32> to vector<1x256xf32>
    %169 = vector.broadcast %168 : vector<1x256xf32> to vector<2x256xf32>
    %170 = arith.mulf %12, %169 : vector<2x256xf32>
    %171 = arith.addf %166, %170 : vector<2x256xf32>
    %c2_134 = arith.constant 2 : index
    %c0_135 = arith.constant 0 : index
    %c0_136 = arith.constant 0 : index
    %172 = vector.load %arg2[%c2_134, %c0_135, %c0_136] : memref<4x1x1xf32, #tpu.memory_space<vmem>>, vector<1x1x1xf32>
    %173 = vector.shape_cast %172 : vector<1x1x1xf32> to vector<1x1xf32>
    %174 = vector.broadcast %173 : vector<1x1xf32> to vector<2x256xf32>
    %175 = arith.addf %171, %174 : vector<2x256xf32>
    %cst_137 = arith.constant 0.000000e+00 : f32
    %176 = vector.broadcast %cst_137 : f32 to vector<2x256xf32>
    %177 = arith.maximumf %175, %176 : vector<2x256xf32>
    %c2_138 = arith.constant 2 : index
    %c0_139 = arith.constant 0 : index
    %c0_140 = arith.constant 0 : index
    %178 = vector.load %arg3[%c2_138, %c0_139, %c0_140] : memref<4x256x32xf32, #tpu.memory_space<vmem>>, vector<1x256x32xf32>
    %179 = vector.shape_cast %178 : vector<1x256x32xf32> to vector<256x32xf32>
    %cst_141 = arith.constant dense<0.000000e+00> : vector<2x32xf32>
    %180 = tpu.matmul %177, %179, %cst_141 {dimension_numbers = #tpu.dot_dimension_numbers<[1], [0], [0], [1], [0, 0, 1, 1], [], []>} : vector<2x256xf32>, vector<256x32xf32>, vector<2x32xf32> -> vector<2x32xf32>
    %181 = arith.addf %125, %180 : vector<2x32xf32>
    %cst_142 = arith.constant 0.000000e+00 : f32
    %182 = vector.broadcast %cst_142 : f32 to vector<2x256xf32>
    %c0_143 = arith.constant 0 : index
    %c3_144 = arith.constant 3 : index
    %c0_145 = arith.constant 0 : index
    %c0_146 = arith.constant 0 : index
    %183 = vector.load %arg1[%c0_143, %c3_144, %c0_145, %c0_146] : memref<9x4x1x256xf32, #tpu.memory_space<vmem>>, vector<1x1x1x256xf32>
    %184 = vector.shape_cast %183 : vector<1x1x1x256xf32> to vector<1x256xf32>
    %185 = vector.broadcast %184 : vector<1x256xf32> to vector<2x256xf32>
    %186 = arith.mulf %4, %185 : vector<2x256xf32>
    %187 = arith.addf %182, %186 : vector<2x256xf32>
    %c1_147 = arith.constant 1 : index
    %c3_148 = arith.constant 3 : index
    %c0_149 = arith.constant 0 : index
    %c0_150 = arith.constant 0 : index
    %188 = vector.load %arg1[%c1_147, %c3_148, %c0_149, %c0_150] : memref<9x4x1x256xf32, #tpu.memory_space<vmem>>, vector<1x1x1x256xf32>
    %189 = vector.shape_cast %188 : vector<1x1x1x256xf32> to vector<1x256xf32>
    %190 = vector.broadcast %189 : vector<1x256xf32> to vector<2x256xf32>
    %191 = arith.mulf %5, %190 : vector<2x256xf32>
    %192 = arith.addf %187, %191 : vector<2x256xf32>
    %c2_151 = arith.constant 2 : index
    %c3_152 = arith.constant 3 : index
    %c0_153 = arith.constant 0 : index
    %c0_154 = arith.constant 0 : index
    %193 = vector.load %arg1[%c2_151, %c3_152, %c0_153, %c0_154] : memref<9x4x1x256xf32, #tpu.memory_space<vmem>>, vector<1x1x1x256xf32>
    %194 = vector.shape_cast %193 : vector<1x1x1x256xf32> to vector<1x256xf32>
    %195 = vector.broadcast %194 : vector<1x256xf32> to vector<2x256xf32>
    %196 = arith.mulf %6, %195 : vector<2x256xf32>
    %197 = arith.addf %192, %196 : vector<2x256xf32>
    %c3_155 = arith.constant 3 : index
    %c3_156 = arith.constant 3 : index
    %c0_157 = arith.constant 0 : index
    %c0_158 = arith.constant 0 : index
    %198 = vector.load %arg1[%c3_155, %c3_156, %c0_157, %c0_158] : memref<9x4x1x256xf32, #tpu.memory_space<vmem>>, vector<1x1x1x256xf32>
    %199 = vector.shape_cast %198 : vector<1x1x1x256xf32> to vector<1x256xf32>
    %200 = vector.broadcast %199 : vector<1x256xf32> to vector<2x256xf32>
    %201 = arith.mulf %7, %200 : vector<2x256xf32>
    %202 = arith.addf %197, %201 : vector<2x256xf32>
    %c4_159 = arith.constant 4 : index
    %c3_160 = arith.constant 3 : index
    %c0_161 = arith.constant 0 : index
    %c0_162 = arith.constant 0 : index
    %203 = vector.load %arg1[%c4_159, %c3_160, %c0_161, %c0_162] : memref<9x4x1x256xf32, #tpu.memory_space<vmem>>, vector<1x1x1x256xf32>
    %204 = vector.shape_cast %203 : vector<1x1x1x256xf32> to vector<1x256xf32>
    %205 = vector.broadcast %204 : vector<1x256xf32> to vector<2x256xf32>
    %206 = arith.mulf %8, %205 : vector<2x256xf32>
    %207 = arith.addf %202, %206 : vector<2x256xf32>
    %c5_163 = arith.constant 5 : index
    %c3_164 = arith.constant 3 : index
    %c0_165 = arith.constant 0 : index
    %c0_166 = arith.constant 0 : index
    %208 = vector.load %arg1[%c5_163, %c3_164, %c0_165, %c0_166] : memref<9x4x1x256xf32, #tpu.memory_space<vmem>>, vector<1x1x1x256xf32>
    %209 = vector.shape_cast %208 : vector<1x1x1x256xf32> to vector<1x256xf32>
    %210 = vector.broadcast %209 : vector<1x256xf32> to vector<2x256xf32>
    %211 = arith.mulf %9, %210 : vector<2x256xf32>
    %212 = arith.addf %207, %211 : vector<2x256xf32>
    %c6_167 = arith.constant 6 : index
    %c3_168 = arith.constant 3 : index
    %c0_169 = arith.constant 0 : index
    %c0_170 = arith.constant 0 : index
    %213 = vector.load %arg1[%c6_167, %c3_168, %c0_169, %c0_170] : memref<9x4x1x256xf32, #tpu.memory_space<vmem>>, vector<1x1x1x256xf32>
    %214 = vector.shape_cast %213 : vector<1x1x1x256xf32> to vector<1x256xf32>
    %215 = vector.broadcast %214 : vector<1x256xf32> to vector<2x256xf32>
    %216 = arith.mulf %10, %215 : vector<2x256xf32>
    %217 = arith.addf %212, %216 : vector<2x256xf32>
    %c7_171 = arith.constant 7 : index
    %c3_172 = arith.constant 3 : index
    %c0_173 = arith.constant 0 : index
    %c0_174 = arith.constant 0 : index
    %218 = vector.load %arg1[%c7_171, %c3_172, %c0_173, %c0_174] : memref<9x4x1x256xf32, #tpu.memory_space<vmem>>, vector<1x1x1x256xf32>
    %219 = vector.shape_cast %218 : vector<1x1x1x256xf32> to vector<1x256xf32>
    %220 = vector.broadcast %219 : vector<1x256xf32> to vector<2x256xf32>
    %221 = arith.mulf %11, %220 : vector<2x256xf32>
    %222 = arith.addf %217, %221 : vector<2x256xf32>
    %c8_175 = arith.constant 8 : index
    %c3_176 = arith.constant 3 : index
    %c0_177 = arith.constant 0 : index
    %c0_178 = arith.constant 0 : index
    %223 = vector.load %arg1[%c8_175, %c3_176, %c0_177, %c0_178] : memref<9x4x1x256xf32, #tpu.memory_space<vmem>>, vector<1x1x1x256xf32>
    %224 = vector.shape_cast %223 : vector<1x1x1x256xf32> to vector<1x256xf32>
    %225 = vector.broadcast %224 : vector<1x256xf32> to vector<2x256xf32>
    %226 = arith.mulf %12, %225 : vector<2x256xf32>
    %227 = arith.addf %222, %226 : vector<2x256xf32>
    %c3_179 = arith.constant 3 : index
    %c0_180 = arith.constant 0 : index
    %c0_181 = arith.constant 0 : index
    %228 = vector.load %arg2[%c3_179, %c0_180, %c0_181] : memref<4x1x1xf32, #tpu.memory_space<vmem>>, vector<1x1x1xf32>
    %229 = vector.shape_cast %228 : vector<1x1x1xf32> to vector<1x1xf32>
    %230 = vector.broadcast %229 : vector<1x1xf32> to vector<2x256xf32>
    %231 = arith.addf %227, %230 : vector<2x256xf32>
    %cst_182 = arith.constant 0.000000e+00 : f32
    %232 = vector.broadcast %cst_182 : f32 to vector<2x256xf32>
    %233 = arith.maximumf %231, %232 : vector<2x256xf32>
    %c3_183 = arith.constant 3 : index
    %c0_184 = arith.constant 0 : index
    %c0_185 = arith.constant 0 : index
    %234 = vector.load %arg3[%c3_183, %c0_184, %c0_185] : memref<4x256x32xf32, #tpu.memory_space<vmem>>, vector<1x256x32xf32>
    %235 = vector.shape_cast %234 : vector<1x256x32xf32> to vector<256x32xf32>
    %cst_186 = arith.constant dense<0.000000e+00> : vector<2x32xf32>
    %236 = tpu.matmul %233, %235, %cst_186 {dimension_numbers = #tpu.dot_dimension_numbers<[1], [0], [0], [1], [0, 0, 1, 1], [], []>} : vector<2x256xf32>, vector<256x32xf32>, vector<2x32xf32> -> vector<2x32xf32>
    %237 = arith.addf %181, %236 : vector<2x32xf32>
    %c0_187 = arith.constant 0 : index
    %c0_188 = arith.constant 0 : index
    %238 = vector.load %arg4[%c0_187, %c0_188] : memref<1x32xf32, #tpu.memory_space<vmem>>, vector<1x32xf32>
    %239 = vector.broadcast %238 : vector<1x32xf32> to vector<2x32xf32>
    %240 = arith.addf %237, %239 : vector<2x32xf32>
    %cst_189 = arith.constant 0.000000e+00 : f32
    %241 = vector.broadcast %cst_189 : f32 to vector<2x32xf32>
    %242 = arith.maximumf %240, %241 : vector<2x32xf32>
    %c0_190 = arith.constant 0 : index
    %c0_191 = arith.constant 0 : index
    %243 = vector.load %arg5[%c0_190, %c0_191] : memref<32x32xf32, #tpu.memory_space<vmem>>, vector<32x32xf32>
    %cst_192 = arith.constant dense<0.000000e+00> : vector<2x32xf32>
    %244 = tpu.matmul %242, %243, %cst_192 {dimension_numbers = #tpu.dot_dimension_numbers<[1], [0], [0], [1], [0, 0, 1, 1], [], []>} : vector<2x32xf32>, vector<32x32xf32>, vector<2x32xf32> -> vector<2x32xf32>
    %c0_193 = arith.constant 0 : index
    %c0_194 = arith.constant 0 : index
    %245 = vector.load %arg6[%c0_193, %c0_194] : memref<1x32xf32, #tpu.memory_space<vmem>>, vector<1x32xf32>
    %246 = vector.broadcast %245 : vector<1x32xf32> to vector<2x32xf32>
    %247 = arith.addf %244, %246 : vector<2x32xf32>
    %cst_195 = arith.constant 0.000000e+00 : f32
    %248 = vector.broadcast %cst_195 : f32 to vector<2x32xf32>
    %249 = arith.maximumf %247, %248 : vector<2x32xf32>
    %c0_196 = arith.constant 0 : index
    %c0_197 = arith.constant 0 : index
    %250 = vector.load %arg7[%c0_196, %c0_197] : memref<32x2xf32, #tpu.memory_space<vmem>>, vector<32x2xf32>
    %cst_198 = arith.constant dense<0.000000e+00> : vector<2x2xf32>
    %251 = tpu.matmul %249, %250, %cst_198 {dimension_numbers = #tpu.dot_dimension_numbers<[1], [0], [0], [1], [0, 0, 1, 1], [], []>} : vector<2x32xf32>, vector<32x2xf32>, vector<2x2xf32> -> vector<2x2xf32>
    %c0_199 = arith.constant 0 : index
    %c0_200 = arith.constant 0 : index
    %252 = vector.load %arg8[%c0_199, %c0_200] : memref<1x2xf32, #tpu.memory_space<vmem>>, vector<1x2xf32>
    %253 = vector.broadcast %252 : vector<1x2xf32> to vector<2x2xf32>
    %254 = arith.addf %251, %253 : vector<2x2xf32>
    %c0_201 = arith.constant 0 : index
    %c0_202 = arith.constant 0 : index
    %255 = vector.load %arg9[%c0_201, %c0_202] : memref<2x2xf32, #tpu.memory_space<vmem>>, vector<2x2xf32>
    tpu.vector_store %arg9[%c0_201, %c0_202], %254 {strides = array<i32>} : memref<2x2xf32, #tpu.memory_space<vmem>>, vector<2x2xf32>,
    return
  }
}

</mosaic_0001>

<llo_original>
// kernel: baseline_net_forward.1
$region0: #{baseline_net_forward.1}
  #allocation0 [shape = 'u32[]', space=smem, size = 0x4, offset = 0x4, fixed_abs, tag = 'smem constant byte address 0x4 - core index']
  #allocation1 [shape = 'u32[144,128]{1,0:T(1,128)}', space=vmem, size = 0x12000, scoped, tag = 'internal scratch']
  #allocation2 [shape = 'f32[2,512]{1,0:T(2,128)}', space=vmem, size = 0x1000, scoped, tag = 'scratch operand']
  %s0 = inlined_call_operand.vmem [shape: f32[2,256], index: 0, kind: input, shape index: {}]
  %s1 = inlined_call_operand.vmem [shape: f32[9,4,1,256], index: 1, kind: input, shape index: {}]
  %s2 = inlined_call_operand.vmem [shape: f32[4,1,1], index: 2, kind: input, shape index: {}]
  %s3 = inlined_call_operand.vmem [shape: f32[4,256,32], index: 3, kind: input, shape index: {}]
  %s4 = inlined_call_operand.vmem [shape: f32[1,32], index: 4, kind: input, shape index: {}]
  %s5 = inlined_call_operand.vmem [shape: f32[32,32], index: 5, kind: input, shape index: {}]
  %s6 = inlined_call_operand.vmem [shape: f32[1,32], index: 6, kind: input, shape index: {}]
  %s7 = inlined_call_operand.vmem [shape: f32[32,2], index: 7, kind: input, shape index: {}]
  %s8 = inlined_call_operand.vmem [shape: f32[1,2], index: 8, kind: input, shape index: {}]
  %s9 = inlined_call_operand.hbm [shape: f32[2,2], index: 9, kind: output, shape index: {}]
  %s10 = sld [smem:[#allocation0]]
  $region46: #{baseline_net_forward.1} parent=0
    _
  %s12 = ssub.s32 1, %s10
  %s13 = scalar_select 0, %s12, %s10
  $region1: #{baseline_net_forward.1} parent=0
    #allocation3 [shape = 'u8[1024]{0}', space=vmem, size = 0x400, scoped, tag = 'output window, operand 0, single buffered']
    #allocation4 [shape = 's32[1]{0}', space=sflag, size = 0x4, scoped, tag = 'scoped memory for baseline_net_forward.1']
    %14 = vsyncpa [#allocation4], 0
    // Predicated region
    $region2: #{baseline_net_forward.1} parent=1 // pred_check
      _
    $region3: #{baseline_net_forward.1} parent=1 // pred_check_branch
      %16 = sbr.rel (0) target = $region5
    $region4: #{baseline_net_forward.1} parent=1 // pred_region
      _
    $region5: #{baseline_net_forward.1} parent=1 // pred_fallthru
      _
    // Predicated region
    $region6: #{baseline_net_forward.1} parent=1 // pred_check
      _
    $region7: #{baseline_net_forward.1} parent=1 // pred_check_branch
      %18 = sbr.rel (0) target = $region9
    $region8: #{baseline_net_forward.1} parent=1 // pred_region
      _
    $region9: #{baseline_net_forward.1} parent=1 // pred_fallthru
      _
    // Predicated region
    $region10: #{baseline_net_forward.1} parent=1 // pred_check
      _
    $region11: #{baseline_net_forward.1} parent=1 // pred_check_branch
      %20 = sbr.rel (0) target = $region13
    $region12: #{baseline_net_forward.1} parent=1 // pred_region
      _
    $region13: #{baseline_net_forward.1} parent=1 // pred_fallthru
      _
    // Predicated region
    $region14: #{baseline_net_forward.1} parent=1 // pred_check
      _
    $region15: #{baseline_net_forward.1} parent=1 // pred_check_branch
      %22 = sbr.rel (0) target = $region17
    $region16: #{baseline_net_forward.1} parent=1 // pred_region
      _
    $region17: #{baseline_net_forward.1} parent=1 // pred_fallthru
      _
    // Predicated region
    $region18: #{baseline_net_forward.1} parent=1 // pred_check
      _
    $region19: #{baseline_net_forward.1} parent=1 // pred_check_branch
      %24 = sbr.rel (0) target = $region21
    $region20: #{baseline_net_forward.1} parent=1 // pred_region
      _
    $region21: #{baseline_net_forward.1} parent=1 // pred_fallthru
      _
    // Predicated region
    $region22: #{baseline_net_forward.1} parent=1 // pred_check
      _
    $region23: #{baseline_net_forward.1} parent=1 // pred_check_branch
      %26 = sbr.rel (0) target = $region25
    $region24: #{baseline_net_forward.1} parent=1 // pred_region
      _
    $region25: #{baseline_net_forward.1} parent=1 // pred_fallthru
      _
    // Predicated region
    $region26: #{baseline_net_forward.1} parent=1 // pred_check
      _
    $region27: #{baseline_net_forward.1} parent=1 // pred_check_branch
      %28 = sbr.rel (0) target = $region29
    $region28: #{baseline_net_forward.1} parent=1 // pred_region
      _
    $region29: #{baseline_net_forward.1} parent=1 // pred_fallthru
      _
    // Predicated region
    $region30: #{baseline_net_forward.1} parent=1 // pred_check
      _
    $region31: #{baseline_net_forward.1} parent=1 // pred_check_branch
      %30 = sbr.rel (0) target = $region33
    $region32: #{baseline_net_forward.1} parent=1 // pred_region
      _
    $region33: #{baseline_net_forward.1} parent=1 // pred_fallthru
      _
    // Predicated region
    $region34: #{baseline_net_forward.1} parent=1 // pred_check
      _
    $region35: #{baseline_net_forward.1} parent=1 // pred_check_branch
      %32 = sbr.rel (0) target = $region37
    $region36: #{baseline_net_forward.1} parent=1 // pred_region
      _
    $region37: #{baseline_net_forward.1} parent=1 // pred_fallthru
      _
    %33 = vst [vmem:[#allocation2] sm:$0xff] 0.0
    %v34 = vld [vmem:[%s0] sm:$0xf]
    %35 = vst [vmem:[#allocation2 + $0x2] sm:$0xf] %v34
    %v36 = vld [vmem:[#allocation2] sm:$0x3f]
    %v37 = vld [vmem:[#allocation2 + $0x2] sm:$0xf]
    %v38 = vld [vmem:[#allocation2 + $0x2] sm:$0x3f]
    %v39 = vld [vmem:[%s1] sm:$0x3]
    %v41 = vlaneseq
    %v42 = vshrl.u32 %v41, 7
    %v43 = vsub.s32 0, %v42
    %v44 = vrot.slane %v39, %v43
    %v45 = vlaneseq
    %v46 = vshrl.u32 %v45, 7
    %v47 = vsub.s32 1, %v46
    %v48 = vrot.slane %v39, %v47
    %v49 = vcombine.low %v44, %v48
    %v51 = vunpack.c.l.s4 1983009808
    %v52 = vunpack.c.0.s8 %v51
    %v53 = vlaneseq
    %v54 = vshrl.u32 %v53, 7
    %v55 = vsub.s32 %v52, %v54
    %v56 = vrot.slane %v49, %v55
    %57 = vrot.lane.b32.xlu0 %v56, 111
    %v58 = vpop.permute.xlu0 %57
    %v59 = vrot.slane %v58, 6
    %vm60 = vcmask 908288
    %v61 = vsel %vm60, %v59, %v58
    %v63 = vmul.f32 %v36, %v61
    %v64 = vadd.f32 %v63, 0.0
    %s65 = scalar_lea.vmem %s1, 8
    %v66 = vld [vmem:[%s65] sm:$0x3]
    %v68 = vlaneseq
    %v69 = vshrl.u32 %v68, 7
    %v70 = vsub.s32 0, %v69
    %v71 = vrot.slane %v66, %v70
    %v72 = vlaneseq
    %v73 = vshrl.u32 %v72, 7
    %v74 = vsub.s32 1, %v73
    %v75 = vrot.slane %v66, %v74
    %v76 = vcombine.low %v71, %v75
    %v78 = vunpack.c.l.s4 1983009808
    %v79 = vunpack.c.0.s8 %v78
    %v80 = vlaneseq
    %v81 = vshrl.u32 %v80, 7
    %v82 = vsub.s32 %v79, %v81
    %v83 = vrot.slane %v76, %v82
    %84 = vrot.lane.b32.xlu0 %v83, 112
    %v85 = vpop.permute.xlu0 %84
    %v86 = vrot.slane %v85, 6
    %vm87 = vcmask 916480
    %v88 = vsel %vm87, %v86, %v85
    %v90 = vmul.f32 %v36, %v88
    %92 = vrot.lane.b32.xlu0 %v90, 127
    %v93 = vpop.permute.xlu0 %92
    %v94 = vrot.slane %v93, 2
    %vm95 = vcmask 1039360
    %v96 = vsel %vm95, %v93, %v94
    %v98 = vadd.f32 %v64, %v96
    %s99 = scalar_lea.vmem %s1, 16
    %v100 = vld [vmem:[%s99] sm:$0x3]
    %v102 = vlaneseq
    %v103 = vshrl.u32 %v102, 7
    %v104 = vsub.s32 0, %v103
    %v105 = vrot.slane %v100, %v104
    %v106 = vlaneseq
    %v107 = vshrl.u32 %v106, 7
    %v108 = vsub.s32 1, %v107
    %v109 = vrot.slane %v100, %v108
    %v110 = vcombine.low %v105, %v109
    %v112 = vunpack.c.l.s4 1983009808
    %v113 = vunpack.c.0.s8 %v112
    %v114 = vlaneseq
    %v115 = vshrl.u32 %v114, 7
    %v116 = vsub.s32 %v113, %v115
    %v117 = vrot.slane %v110, %v116
    %118 = vrot.lane.b32.xlu0 %v117, 113
    %v119 = vpop.permute.xlu0 %118
    %v120 = vrot.slane %v119, 6
    %vm121 = vcmask 924672
    %v122 = vsel %vm121, %v120, %v119
    %v124 = vmul.f32 %v36, %v122
    %126 = vrot.lane.b32.xlu0 %v124, 126
    %v127 = vpop.permute.xlu0 %126
    %v128 = vrot.slane %v127, 2
    %vm129 = vcmask 1031168
    %v130 = vsel %vm129, %v127, %v128
    %v132 = vadd.f32 %v98, %v130
    %s133 = scalar_lea.vmem %s1, 24
    %v134 = vld [vmem:[%s133] sm:$0x3]
    %v136 = vlaneseq
    %v137 = vshrl.u32 %v136, 7
    %v138 = vsub.s32 0, %v137
    %v139 = vrot.slane %v134, %v138
    %v140 = vlaneseq
    %v141 = vshrl.u32 %v140, 7
    %v142 = vsub.s32 1, %v141
    %v143 = vrot.slane %v134, %v142
    %v144 = vcombine.low %v139, %v143
    %v146 = vunpack.c.l.s4 1983009808
    %v147 = vunpack.c.0.s8 %v146
    %v148 = vlaneseq
    %v149 = vshrl.u32 %v148, 7
    %v150 = vsub.s32 %v147, %v149
    %v151 = vrot.slane %v144, %v150
    %152 = vrot.lane.b32.xlu0 %v151, 127
    %v153 = vpop.permute.xlu0 %152
    %v154 = vrot.slane %v153, 6
    %v155 = vsel %vm95, %v154, %v153
    %v157 = vmul.f32 %v36, %v155
    %159 = vrot.lane.b32.xlu0 %v157, 112
    %v160 = vpop.permute.xlu0 %159
    %v161 = vrot.slane %v160, 2
    %v162 = vsel %vm87, %v160, %v161
    %v164 = vadd.f32 %v132, %v162
    %s165 = scalar_lea.vmem %s1, 32
    %v166 = vld [vmem:[%s165] sm:$0x3]
    %v168 = vlaneseq
    %v169 = vshrl.u32 %v168, 7
    %v170 = vsub.s32 0, %v169
    %v171 = vrot.slane %v166, %v170
    %v172 = vlaneseq
    %v173 = vshrl.u32 %v172, 7
    %v174 = vsub.s32 1, %v173
    %v175 = vrot.slane %v166, %v174
    %v176 = vcombine.low %v171, %v175
    %v178 = vunpack.c.l.s4 1983009808
    %v179 = vunpack.c.0.s8 %v178
    %v180 = vlaneseq
    %v181 = vshrl.u32 %v180, 7
    %v182 = vsub.s32 %v179, %v181
    %v183 = vrot.slane %v176, %v182
    %v185 = vmul.f32 %v37, %v183
    %187 = vrot.lane.b32.xlu0 %v185, 111
    %v188 = vpop.permute.xlu0 %187
    %v189 = vrot.slane %v188, 6
    %v190 = vsel %vm60, %v189, %v188
    %v192 = vadd.f32 %v164, %v190
    %s193 = scalar_lea.vmem %s1, 40
    %v194 = vld [vmem:[%s193] sm:$0x3]
    %v196 = vlaneseq
    %v197 = vshrl.u32 %v196, 7
    %v198 = vsub.s32 0, %v197
    %v199 = vrot.slane %v194, %v198
    %v200 = vlaneseq
    %v201 = vshrl.u32 %v200, 7
    %v202 = vsub.s32 1, %v201
    %v203 = vrot.slane %v194, %v202
    %v204 = vcombine.low %v199, %v203
    %v206 = vunpack.c.l.s4 1983009808
    %v207 = vunpack.c.0.s8 %v206
    %v208 = vlaneseq
    %v209 = vshrl.u32 %v208, 7
    %v210 = vsub.s32 %v207, %v209
    %v211 = vrot.slane %v204, %v210
    %212 = vrot.lane.b32.xlu0 %v211, 1
    %v213 = vpop.permute.xlu0 %212
    %v214 = vrot.slane %v213, 6
    %vm215 = vcmask 7168
    %v216 = vsel %vm215, %v214, %v213
    %v218 = vmul.f32 %v38, %v216
    %220 = vrot.lane.b32.xlu0 %v218, 110
    %v221 = vpop.permute.xlu0 %220
    %v222 = vrot.slane %v221, 6
    %vm223 = vcmask 900096
    %v224 = vsel %vm223, %v222, %v221
    %v226 = vadd.f32 %v192, %v224
    %s227 = scalar_lea.vmem %s1, 48
    %v228 = vld [vmem:[%s227] sm:$0x3]
    %v230 = vlaneseq
    %v231 = vshrl.u32 %v230, 7
    %v232 = vsub.s32 0, %v231
    %v233 = vrot.slane %v228, %v232
    %v234 = vlaneseq
    %v235 = vshrl.u32 %v234, 7
    %v236 = vsub.s32 1, %v235
    %v237 = vrot.slane %v228, %v236
    %v238 = vcombine.low %v233, %v237
    %v240 = vunpack.c.l.s4 1983009808
    %v241 = vunpack.c.0.s8 %v240
    %v242 = vlaneseq
    %v243 = vshrl.u32 %v242, 7
    %v244 = vsub.s32 %v241, %v243
    %v245 = vrot.slane %v238, %v244
    %246 = vrot.lane.b32.xlu0 %v245, 15
    %v247 = vpop.permute.xlu0 %246
    %v248 = vrot.slane %v247, 6
    %vm249 = vcmask 121856
    %v250 = vsel %vm249, %v248, %v247
    %v252 = vmul.f32 %v38, %v250
    %254 = vrot.lane.b32.xlu0 %v252, 96
    %v255 = vpop.permute.xlu0 %254
    %v256 = vrot.slane %v255, 6
    %vm257 = vcmask 785408
    %v258 = vsel %vm257, %v256, %v255
    %v260 = vadd.f32 %v226, %v258
    %s261 = scalar_lea.vmem %s1, 56
    %v262 = vld [vmem:[%s261] sm:$0x3]
    %v264 = vlaneseq
    %v265 = vshrl.u32 %v264, 7
    %v266 = vsub.s32 0, %v265
    %v267 = vrot.slane %v262, %v266
    %v268 = vlaneseq
    %v269 = vshrl.u32 %v268, 7
    %v270 = vsub.s32 1, %v269
    %v271 = vrot.slane %v262, %v270
    %v272 = vcombine.low %v267, %v271
    %v274 = vunpack.c.l.s4 1983009808
    %v275 = vunpack.c.0.s8 %v274
    %v276 = vlaneseq
    %v277 = vshrl.u32 %v276, 7
    %v278 = vsub.s32 %v275, %v277
    %v279 = vrot.slane %v272, %v278
    %280 = vrot.lane.b32.xlu0 %v279, 16
    %v281 = vpop.permute.xlu0 %280
    %v282 = vrot.slane %v281, 6
    %vm283 = vcmask 130048
    %v284 = vsel %vm283, %v282, %v281
    %v286 = vmul.f32 %v38, %v284
    %288 = vrot.lane.b32.xlu0 %v286, 95
    %v289 = vpop.permute.xlu0 %288
    %v290 = vrot.slane %v289, 6
    %vm291 = vcmask 777216
    %v292 = vsel %vm291, %v290, %v289
    %v294 = vadd.f32 %v260, %v292
    %s295 = scalar_lea.vmem %s1, 64
    %v296 = vld [vmem:[%s295] sm:$0x3]
    %v298 = vlaneseq
    %v299 = vshrl.u32 %v298, 7
    %v300 = vsub.s32 0, %v299
    %v301 = vrot.slane %v296, %v300
    %v302 = vlaneseq
    %v303 = vshrl.u32 %v302, 7
    %v304 = vsub.s32 1, %v303
    %v305 = vrot.slane %v296, %v304
    %v306 = vcombine.low %v301, %v305
    %v308 = vunpack.c.l.s4 1983009808
    %v309 = vunpack.c.0.s8 %v308
    %v310 = vlaneseq
    %v311 = vshrl.u32 %v310, 7
    %v312 = vsub.s32 %v309, %v311
    %v313 = vrot.slane %v306, %v312
    %314 = vrot.lane.b32.xlu0 %v313, 17
    %v315 = vpop.permute.xlu0 %314
    %v316 = vrot.slane %v315, 6
    %vm317 = vcmask 138240
    %v318 = vsel %vm317, %v316, %v315
    %v320 = vmul.f32 %v38, %v318
    %322 = vrot.lane.b32.xlu0 %v320, 94
    %v323 = vpop.permute.xlu0 %322
    %v324 = vrot.slane %v323, 6
    %vm325 = vcmask 769024
    %v326 = vsel %vm325, %v324, %v323
    %v328 = vadd.f32 %v294, %v326
    %v329 = vld [vmem:[%s2] sm:$0x1]
    %v331 = vlaneseq
    %v332 = vshrl.u32 %v331, 7
    %v333 = vsub.s32 0, %v332
    %v334 = vrot.slane %v329, %v333
    %335 = vset.pattern.permute.xlu0 0
    %336 = vperm.xlu0 %335, %v334
    %v337 = vpop.permute.xlu0 %336
    %v339 = vadd.f32 %v328, %v337
    %v340 = vmax.f32 %v339, 0.0
    %v341 = vld [vmem:[%s3] sm:$0xff]
    %v342 = vld [vmem:[%s3 + $0x8] sm:$0xff]
    %v343 = vld [vmem:[%s3 + $0x10] sm:$0xff]
    %v344 = vld [vmem:[%s3 + $0x18] sm:$0xff]
    %v345 = vld [vmem:[%s3 + $0x20] sm:$0xff]
    %v346 = vld [vmem:[%s3 + $0x28] sm:$0xff]
    %v347 = vld [vmem:[%s3 + $0x30] sm:$0xff]
    %v348 = vld [vmem:[%s3 + $0x38] sm:$0xff]
    %v349 = vld [vmem:[%s3 + $0x40] sm:$0xff]
    %v350 = vld [vmem:[%s3 + $0x48] sm:$0xff]
    %v351 = vld [vmem:[%s3 + $0x50] sm:$0xff]
    %v352 = vld [vmem:[%s3 + $0x58] sm:$0xff]
    %v353 = vld [vmem:[%s3 + $0x60] sm:$0xff]
    %v354 = vld [vmem:[%s3 + $0x68] sm:$0xff]
    %v355 = vld [vmem:[%s3 + $0x70] sm:$0xff]
    %v356 = vld [vmem:[%s3 + $0x78] sm:$0xff]
    %v357 = vld [vmem:[%s3 + $0x80] sm:$0xff]
    %v358 = vld [vmem:[%s3 + $0x88] sm:$0xff]
    %v359 = vld [vmem:[%s3 + $0x90] sm:$0xff]
    %v360 = vld [vmem:[%s3 + $0x98] sm:$0xff]
    %v361 = vld [vmem:[%s3 + $0xa0] sm:$0xff]
    %v362 = vld [vmem:[%s3 + $0xa8] sm:$0xff]
    %v363 = vld [vmem:[%s3 + $0xb0] sm:$0xff]
    %v364 = vld [vmem:[%s3 + $0xb8] sm:$0xff]
    %v365 = vld [vmem:[%s3 + $0xc0] sm:$0xff]
    %v366 = vld [vmem:[%s3 + $0xc8] sm:$0xff]
    %v367 = vld [vmem:[%s3 + $0xd0] sm:$0xff]
    %v368 = vld [vmem:[%s3 + $0xd8] sm:$0xff]
    %v369 = vld [vmem:[%s3 + $0xe0] sm:$0xff]
    %v370 = vld [vmem:[%s3 + $0xe8] sm:$0xff]
    %v371 = vld [vmem:[%s3 + $0xf0] sm:$0xff]
    %v372 = vld [vmem:[%s3 + $0xf8] sm:$0xff]
    %s373 = scalar_lea.vmem %s1, 2
    %v374 = vld [vmem:[%s373] sm:$0x3]
    %v376 = vlaneseq
    %v377 = vshrl.u32 %v376, 7
    %v378 = vsub.s32 0, %v377
    %v379 = vrot.slane %v374, %v378
    %v380 = vlaneseq
    %v381 = vshrl.u32 %v380, 7
    %v382 = vsub.s32 1, %v381
    %v383 = vrot.slane %v374, %v382
    %v384 = vcombine.low %v379, %v383
    %v386 = vunpack.c.l.s4 1983009808
    %v387 = vunpack.c.0.s8 %v386
    %v388 = vlaneseq
    %v389 = vshrl.u32 %v388, 7
    %v390 = vsub.s32 %v387, %v389
    %v391 = vrot.slane %v384, %v390
    %392 = vrot.lane.b32.xlu0 %v391, 111
    %v393 = vpop.permute.xlu0 %392
    %v394 = vrot.slane %v393, 6
    %v395 = vsel %vm60, %v394, %v393
    %v397 = vmul.f32 %v36, %v395
    %v398 = vadd.f32 %v397, 0.0
    %s399 = scalar_lea.vmem %s1, 10
    %v400 = vld [vmem:[%s399] sm:$0x3]
    %v402 = vlaneseq
    %v403 = vshrl.u32 %v402, 7
    %v404 = vsub.s32 0, %v403
    %v405 = vrot.slane %v400, %v404
    %v406 = vlaneseq
    %v407 = vshrl.u32 %v406, 7
    %v408 = vsub.s32 1, %v407
    %v409 = vrot.slane %v400, %v408
    %v410 = vcombine.low %v405, %v409
    %v412 = vunpack.c.l.s4 1983009808
    %v413 = vunpack.c.0.s8 %v412
    %v414 = vlaneseq
    %v415 = vshrl.u32 %v414, 7
    %v416 = vsub.s32 %v413, %v415
    %v417 = vrot.slane %v410, %v416
    %418 = vrot.lane.b32.xlu0 %v417, 112
    %v419 = vpop.permute.xlu0 %418
    %v420 = vrot.slane %v419, 6
    %v421 = vsel %vm87, %v420, %v419
    %v423 = vmul.f32 %v36, %v421
    %425 = vrot.lane.b32.xlu0 %v423, 127
    %v426 = vpop.permute.xlu0 %425
    %v427 = vrot.slane %v426, 2
    %v428 = vsel %vm95, %v426, %v427
    %v430 = vadd.f32 %v398, %v428
    %s431 = scalar_lea.vmem %s1, 18
    %v432 = vld [vmem:[%s431] sm:$0x3]
    %v434 = vlaneseq
    %v435 = vshrl.u32 %v434, 7
    %v436 = vsub.s32 0, %v435
    %v437 = vrot.slane %v432, %v436
    %v438 = vlaneseq
    %v439 = vshrl.u32 %v438, 7
    %v440 = vsub.s32 1, %v439
    %v441 = vrot.slane %v432, %v440
    %v442 = vcombine.low %v437, %v441
    %v444 = vunpack.c.l.s4 1983009808
    %v445 = vunpack.c.0.s8 %v444
    %v446 = vlaneseq
    %v447 = vshrl.u32 %v446, 7
    %v448 = vsub.s32 %v445, %v447
    %v449 = vrot.slane %v442, %v448
    %450 = vrot.lane.b32.xlu0 %v449, 113
    %v451 = vpop.permute.xlu0 %450
    %v452 = vrot.slane %v451, 6
    %v453 = vsel %vm121, %v452, %v451
    %v455 = vmul.f32 %v36, %v453
    %457 = vrot.lane.b32.xlu0 %v455, 126
    %v458 = vpop.permute.xlu0 %457
    %v459 = vrot.slane %v458, 2
    %v460 = vsel %vm129, %v458, %v459
    %v462 = vadd.f32 %v430, %v460
    %s463 = scalar_lea.vmem %s1, 26
    %v464 = vld [vmem:[%s463] sm:$0x3]
    %v466 = vlaneseq
    %v467 = vshrl.u32 %v466, 7
    %v468 = vsub.s32 0, %v467
    %v469 = vrot.slane %v464, %v468
    %v470 = vlaneseq
    %v471 = vshrl.u32 %v470, 7
    %v472 = vsub.s32 1, %v471
    %v473 = vrot.slane %v464, %v472
    %v474 = vcombine.low %v469, %v473
    %v476 = vunpack.c.l.s4 1983009808
    %v477 = vunpack.c.0.s8 %v476
    %v478 = vlaneseq
    %v479 = vshrl.u32 %v478, 7
    %v480 = vsub.s32 %v477, %v479
    %v481 = vrot.slane %v474, %v480
    %482 = vrot.lane.b32.xlu0 %v481, 127
    %v483 = vpop.permute.xlu0 %482
    %v484 = vrot.slane %v483, 6
    %v485 = vsel %vm95, %v484, %v483
    %v487 = vmul.f32 %v36, %v485
    %489 = vrot.lane.b32.xlu0 %v487, 112
    %v490 = vpop.permute.xlu0 %489
    %v491 = vrot.slane %v490, 2
    %v492 = vsel %vm87, %v490, %v491
    %v494 = vadd.f32 %v462, %v492
    %s495 = scalar_lea.vmem %s1, 34
    %v496 = vld [vmem:[%s495] sm:$0x3]
    %v498 = vlaneseq
    %v499 = vshrl.u32 %v498, 7
    %v500 = vsub.s32 0, %v499
    %v501 = vrot.slane %v496, %v500
    %v502 = vlaneseq
    %v503 = vshrl.u32 %v502, 7
    %v504 = vsub.s32 1, %v503
    %v505 = vrot.slane %v496, %v504
    %v506 = vcombine.low %v501, %v505
    %v508 = vunpack.c.l.s4 1983009808
    %v509 = vunpack.c.0.s8 %v508
    %v510 = vlaneseq
    %v511 = vshrl.u32 %v510, 7
    %v512 = vsub.s32 %v509, %v511
    %v513 = vrot.slane %v506, %v512
    %v515 = vmul.f32 %v37, %v513
    %517 = vrot.lane.b32.xlu0 %v515, 111
    %v518 = vpop.permute.xlu0 %517
    %v519 = vrot.slane %v518, 6
    %v520 = vsel %vm60, %v519, %v518
    %v522 = vadd.f32 %v494, %v520
    %s523 = scalar_lea.vmem %s1, 42
    %v524 = vld [vmem:[%s523] sm:$0x3]
    %v526 = vlaneseq
    %v527 = vshrl.u32 %v526, 7
    %v528 = vsub.s32 0, %v527
    %v529 = vrot.slane %v524, %v528
    %v530 = vlaneseq
    %v531 = vshrl.u32 %v530, 7
    %v532 = vsub.s32 1, %v531
    %v533 = vrot.slane %v524, %v532
    %v534 = vcombine.low %v529, %v533
    %v536 = vunpack.c.l.s4 1983009808
    %v537 = vunpack.c.0.s8 %v536
    %v538 = vlaneseq
    %v539 = vshrl.u32 %v538, 7
    %v540 = vsub.s32 %v537, %v539
    %v541 = vrot.slane %v534, %v540
    %542 = vrot.lane.b32.xlu0 %v541, 1
    %v543 = vpop.permute.xlu0 %542
    %v544 = vrot.slane %v543, 6
    %v545 = vsel %vm215, %v544, %v543
    %v547 = vmul.f32 %v38, %v545
    %549 = vrot.lane.b32.xlu0 %v547, 110
    %v550 = vpop.permute.xlu0 %549
    %v551 = vrot.slane %v550, 6
    %v552 = vsel %vm223, %v551, %v550
    %v554 = vadd.f32 %v522, %v552
    %s555 = scalar_lea.vmem %s1, 50
    %v556 = vld [vmem:[%s555] sm:$0x3]
    %v558 = vlaneseq
    %v559 = vshrl.u32 %v558, 7
    %v560 = vsub.s32 0, %v559
    %v561 = vrot.slane %v556, %v560
    %v562 = vlaneseq
    %v563 = vshrl.u32 %v562, 7
    %v564 = vsub.s32 1, %v563
    %v565 = vrot.slane %v556, %v564
    %v566 = vcombine.low %v561, %v565
    %v568 = vunpack.c.l.s4 1983009808
    %v569 = vunpack.c.0.s8 %v568
    %v570 = vlaneseq
    %v571 = vshrl.u32 %v570, 7
    %v572 = vsub.s32 %v569, %v571
    %v573 = vrot.slane %v566, %v572
    %574 = vrot.lane.b32.xlu0 %v573, 15
    %v575 = vpop.permute.xlu0 %574
    %v576 = vrot.slane %v575, 6
    %v577 = vsel %vm249, %v576, %v575
    %v579 = vmul.f32 %v38, %v577
    %581 = vrot.lane.b32.xlu0 %v579, 96
    %v582 = vpop.permute.xlu0 %581
    %v583 = vrot.slane %v582, 6
    %v584 = vsel %vm257, %v583, %v582
    %v586 = vadd.f32 %v554, %v584
    %s587 = scalar_lea.vmem %s1, 58
    %v588 = vld [vmem:[%s587] sm:$0x3]
    %v590 = vlaneseq
    %v591 = vshrl.u32 %v590, 7
    %v592 = vsub.s32 0, %v591
    %v593 = vrot.slane %v588, %v592
    %v594 = vlaneseq
    %v595 = vshrl.u32 %v594, 7
    %v596 = vsub.s32 1, %v595
    %v597 = vrot.slane %v588, %v596
    %v598 = vcombine.low %v593, %v597
    %v600 = vunpack.c.l.s4 1983009808
    %v601 = vunpack.c.0.s8 %v600
    %v602 = vlaneseq
    %v603 = vshrl.u32 %v602, 7
    %v604 = vsub.s32 %v601, %v603
    %v605 = vrot.slane %v598, %v604
    %606 = vrot.lane.b32.xlu0 %v605, 16
    %v607 = vpop.permute.xlu0 %606
    %v608 = vrot.slane %v607, 6
    %v609 = vsel %vm283, %v608, %v607
    %v611 = vmul.f32 %v38, %v609
    %613 = vrot.lane.b32.xlu0 %v611, 95
    %v614 = vpop.permute.xlu0 %613
    %v615 = vrot.slane %v614, 6
    %v616 = vsel %vm291, %v615, %v614
    %v618 = vadd.f32 %v586, %v616
    %s619 = scalar_lea.vmem %s1, 66
    %v620 = vld [vmem:[%s619] sm:$0x3]
    %v622 = vlaneseq
    %v623 = vshrl.u32 %v622, 7
    %v624 = vsub.s32 0, %v623
    %v625 = vrot.slane %v620, %v624
    %v626 = vlaneseq
    %v627 = vshrl.u32 %v626, 7
    %v628 = vsub.s32 1, %v627
    %v629 = vrot.slane %v620, %v628
    %v630 = vcombine.low %v625, %v629
    %v632 = vunpack.c.l.s4 1983009808
    %v633 = vunpack.c.0.s8 %v632
    %v634 = vlaneseq
    %v635 = vshrl.u32 %v634, 7
    %v636 = vsub.s32 %v633, %v635
    %v637 = vrot.slane %v630, %v636
    %638 = vrot.lane.b32.xlu0 %v637, 17
    %v639 = vpop.permute.xlu0 %638
    %v640 = vrot.slane %v639, 6
    %v641 = vsel %vm317, %v640, %v639
    %v643 = vmul.f32 %v38, %v641
    %645 = vrot.lane.b32.xlu0 %v643, 94
    %v646 = vpop.permute.xlu0 %645
    %v647 = vrot.slane %v646, 6
    %v648 = vsel %vm325, %v647, %v646
    %v650 = vadd.f32 %v618, %v648
    %s651 = scalar_lea.vmem %s2, 1
    %v652 = vld [vmem:[%s651] sm:$0x1]
    %v654 = vlaneseq
    %v655 = vshrl.u32 %v654, 7
    %v656 = vsub.s32 0, %v655
    %v657 = vrot.slane %v652, %v656
    %658 = vset.pattern.permute.xlu0 0
    %659 = vperm.xlu0 %658, %v657
    %v660 = vpop.permute.xlu0 %659
    %v662 = vadd.f32 %v650, %v660
    %v663 = vmax.f32 %v662, 0.0
    %s664 = scalar_lea.vmem %s3, 256
    %v665 = vld [vmem:[%s664] sm:$0xff]
    %v666 = vld [vmem:[%s664 + $0x8] sm:$0xff]
    %v667 = vld [vmem:[%s664 + $0x10] sm:$0xff]
    %v668 = vld [vmem:[%s664 + $0x18] sm:$0xff]
    %v669 = vld [vmem:[%s664 + $0x20] sm:$0xff]
    %v670 = vld [vmem:[%s664 + $0x28] sm:$0xff]
    %v671 = vld [vmem:[%s664 + $0x30] sm:$0xff]
    %v672 = vld [vmem:[%s664 + $0x38] sm:$0xff]
    %v673 = vld [vmem:[%s664 + $0x40] sm:$0xff]
    %v674 = vld [vmem:[%s664 + $0x48] sm:$0xff]
    %v675 = vld [vmem:[%s664 + $0x50] sm:$0xff]
    %v676 = vld [vmem:[%s664 + $0x58] sm:$0xff]
    %v677 = vld [vmem:[%s664 + $0x60] sm:$0xff]
    %v678 = vld [vmem:[%s664 + $0x68] sm:$0xff]
    %v679 = vld [vmem:[%s664 + $0x70] sm:$0xff]
    %v680 = vld [vmem:[%s664 + $0x78] sm:$0xff]
    %v681 = vld [vmem:[%s664 + $0x80] sm:$0xff]
    %v682 = vld [vmem:[%s664 + $0x88] sm:$0xff]
    %v683 = vld [vmem:[%s664 + $0x90] sm:$0xff]
    %v684 = vld [vmem:[%s664 + $0x98] sm:$0xff]
    %v685 = vld [vmem:[%s664 + $0xa0] sm:$0xff]
    %v686 = vld [vmem:[%s664 + $0xa8] sm:$0xff]
    %v687 = vld [vmem:[%s664 + $0xb0] sm:$0xff]
    %v688 = vld [vmem:[%s664 + $0xb8] sm:$0xff]
    %v689 = vld [vmem:[%s664 + $0xc0] sm:$0xff]
    %v690 = vld [vmem:[%s664 + $0xc8] sm:$0xff]
    %v691 = vld [vmem:[%s664 + $0xd0] sm:$0xff]
    %v692 = vld [vmem:[%s664 + $0xd8] sm:$0xff]
    %v693 = vld [vmem:[%s664 + $0xe0] sm:$0xff]
    %v694 = vld [vmem:[%s664 + $0xe8] sm:$0xff]
    %v695 = vld [vmem:[%s664 + $0xf0] sm:$0xff]
    %v696 = vld [vmem:[%s664 + $0xf8] sm:$0xff]
    %v698 = vcombine.high %v663, %v663
    %v700 = vunpack.c.l.s4 1983009808
    %v701 = vunpack.c.0.s8 %v700
    %v702 = vlaneseq
    %v703 = vshrl.u32 %v702, 7
    %v704 = vsub.s32 %v701, %v703
    %v705 = vrot.slane %v663, %v704
    %v707 = vunpack.c.l.s4 1983009808
    %v708 = vunpack.c.0.s8 %v707
    %v709 = vlaneseq
    %v710 = vshrl.u32 %v709, 7
    %v711 = vsub.s32 %v708, %v710
    %v712 = vrot.slane %v698, %v711
    %v713 = vcombine.high %v705, %v705
    %714 = vrot.lane.b32.xlu0 %v705, 17
    %v715 = vpop.permute.xlu0 %714
    %716 = vrot.lane.b32.xlu0 %v713, 17
    %v717 = vpop.permute.xlu0 %716
    %718 = vrot.lane.b32.xlu0 %v712, 17
    %v719 = vpop.permute.xlu0 %718
    %v720 = vsel %vm317, %v715, %v717
    %v721 = vsel %vm317, %v717, %v719
    %724 = vmatprep.subr.mxu0 0.0
    %725 = vmatpush1.msra.mxu0 %v680
    %726 = vmatprep.subr.mxu0 0.0
    %727 = vmatpush1.msra.mxu0 %v679
    %728 = vmatprep.subr.mxu0 0.0
    %729 = vmatpush1.msra.mxu0 %v678
    %730 = vmatprep.subr.mxu0 0.0
    %731 = vmatpush1.msra.mxu0 %v677
    %732 = vmatprep.subr.mxu0 0.0
    %733 = vmatpush1.msra.mxu0 %v676
    %734 = vmatprep.subr.mxu0 0.0
    %735 = vmatpush1.msra.mxu0 %v675
    %736 = vmatprep.subr.mxu0 0.0
    %737 = vmatpush1.msra.mxu0 %v674
    %738 = vmatprep.subr.mxu0 0.0
    %739 = vmatpush1.msra.mxu0 %v673
    %740 = vmatprep.subr.mxu0 0.0
    %741 = vmatpush1.msra.mxu0 %v672
    %742 = vmatprep.subr.mxu0 0.0
    %743 = vmatpush1.msra.mxu0 %v671
    %744 = vmatprep.subr.mxu0 0.0
    %745 = vmatpush1.msra.mxu0 %v670
    %746 = vmatprep.subr.mxu0 0.0
    %747 = vmatpush1.msra.mxu0 %v669
    %748 = vmatprep.subr.mxu0 0.0
    %749 = vmatpush1.msra.mxu0 %v668
    %750 = vmatprep.subr.mxu0 0.0
    %751 = vmatpush1.msra.mxu0 %v667
    %752 = vmatprep.subr.mxu0 0.0
    %753 = vmatpush1.msra.mxu0 %v666
    %754 = vmatprep.subr.mxu0 0.0
    %755 = vmatpush1.msra.mxu0 %v665
    %756 = vmatprep.subr.mxu0 0.0
    %757 = vmatpush2.msra.mxu0 %v696
    %758 = vmatprep.subr.mxu0 0.0
    %759 = vmatpush2.msra.mxu0 %v695
    %760 = vmatprep.subr.mxu0 0.0
    %761 = vmatpush2.msra.mxu0 %v694
    %762 = vmatprep.subr.mxu0 0.0
    %763 = vmatpush2.msra.mxu0 %v693
    %764 = vmatprep.subr.mxu0 0.0
    %765 = vmatpush2.msra.mxu0 %v692
    %766 = vmatprep.subr.mxu0 0.0
    %767 = vmatpush2.msra.mxu0 %v691
    %768 = vmatprep.subr.mxu0 0.0
    %769 = vmatpush2.msra.mxu0 %v690
    %770 = vmatprep.subr.mxu0 0.0
    %771 = vmatpush2.msra.mxu0 %v689
    %772 = vmatprep.subr.mxu0 0.0
    %773 = vmatpush2.msra.mxu0 %v688
    %774 = vmatprep.subr.mxu0 0.0
    %775 = vmatpush2.msra.mxu0 %v687
    %776 = vmatprep.subr.mxu0 0.0
    %777 = vmatpush2.msra.mxu0 %v686
    %778 = vmatprep.subr.mxu0 0.0
    %779 = vmatpush2.msra.mxu0 %v685
    %780 = vmatprep.subr.mxu0 0.0
    %781 = vmatpush2.msra.mxu0 %v684
    %782 = vmatprep.subr.mxu0 0.0
    %783 = vmatpush2.msra.mxu0 %v683
    %784 = vmatprep.subr.mxu0 0.0
    %785 = vmatpush2.msra.mxu0 %v682
    %786 = vmatprep.subr.mxu0 0.0
    %787 = vmatpush2.msra.mxu0 %v681
    %788 = vmatprep.mubr.f32.mxu0 %v721
    %789 = vmatmul.mubr.f32.gmra.mxu0 %v720
    %v790 = vpop.f32.mrf.mxu0
    %v791 = vadd.f32 0.0, %v790
    %v792 = vpop.f32.mrf.mxu0
    %793 = vdwg.mxu0
    %v795 = vcombine.high %v340, %v340
    %v797 = vunpack.c.l.s4 1983009808
    %v798 = vunpack.c.0.s8 %v797
    %v799 = vlaneseq
    %v800 = vshrl.u32 %v799, 7
    %v801 = vsub.s32 %v798, %v800
    %v802 = vrot.slane %v340, %v801
    %v804 = vunpack.c.l.s4 1983009808
    %v805 = vunpack.c.0.s8 %v804
    %v806 = vlaneseq
    %v807 = vshrl.u32 %v806, 7
    %v808 = vsub.s32 %v805, %v807
    %v809 = vrot.slane %v795, %v808
    %v810 = vcombine.high %v802, %v802
    %811 = vrot.lane.b32.xlu0 %v802, 17
    %v812 = vpop.permute.xlu0 %811
    %813 = vrot.lane.b32.xlu0 %v810, 17
    %v814 = vpop.permute.xlu0 %813
    %815 = vrot.lane.b32.xlu0 %v809, 17
    %v816 = vpop.permute.xlu0 %815
    %v817 = vsel %vm317, %v812, %v814
    %v818 = vsel %vm317, %v814, %v816
    %821 = vmatprep.subr.mxu0 0.0
    %822 = vmatpush1.msra.mxu0 %v356
    %823 = vmatprep.subr.mxu0 0.0
    %824 = vmatpush1.msra.mxu0 %v355
    %825 = vmatprep.subr.mxu0 0.0
    %826 = vmatpush1.msra.mxu0 %v354
    %827 = vmatprep.subr.mxu0 0.0
    %828 = vmatpush1.msra.mxu0 %v353
    %829 = vmatprep.subr.mxu0 0.0
    %830 = vmatpush1.msra.mxu0 %v352
    %831 = vmatprep.subr.mxu0 0.0
    %832 = vmatpush1.msra.mxu0 %v351
    %833 = vmatprep.subr.mxu0 0.0
    %834 = vmatpush1.msra.mxu0 %v350
    %835 = vmatprep.subr.mxu0 0.0
    %836 = vmatpush1.msra.mxu0 %v349
    %837 = vmatprep.subr.mxu0 0.0
    %838 = vmatpush1.msra.mxu0 %v348
    %839 = vmatprep.subr.mxu0 0.0
    %840 = vmatpush1.msra.mxu0 %v347
    %841 = vmatprep.subr.mxu0 0.0
    %842 = vmatpush1.msra.mxu0 %v346
    %843 = vmatprep.subr.mxu0 0.0
    %844 = vmatpush1.msra.mxu0 %v345
    %845 = vmatprep.subr.mxu0 0.0
    %846 = vmatpush1.msra.mxu0 %v344
    %847 = vmatprep.subr.mxu0 0.0
    %848 = vmatpush1.msra.mxu0 %v343
    %849 = vmatprep.subr.mxu0 0.0
    %850 = vmatpush1.msra.mxu0 %v342
    %851 = vmatprep.subr.mxu0 0.0
    %852 = vmatpush1.msra.mxu0 %v341
    %853 = vmatprep.subr.mxu0 0.0
    %854 = vmatpush2.msra.mxu0 %v372
    %855 = vmatprep.subr.mxu0 0.0
    %856 = vmatpush2.msra.mxu0 %v371
    %857 = vmatprep.subr.mxu0 0.0
    %858 = vmatpush2.msra.mxu0 %v370
    %859 = vmatprep.subr.mxu0 0.0
    %860 = vmatpush2.msra.mxu0 %v369
    %861 = vmatprep.subr.mxu0 0.0
    %862 = vmatpush2.msra.mxu0 %v368
    %863 = vmatprep.subr.mxu0 0.0
    %864 = vmatpush2.msra.mxu0 %v367
    %865 = vmatprep.subr.mxu0 0.0
    %866 = vmatpush2.msra.mxu0 %v366
    %867 = vmatprep.subr.mxu0 0.0
    %868 = vmatpush2.msra.mxu0 %v365
    %869 = vmatprep.subr.mxu0 0.0
    %870 = vmatpush2.msra.mxu0 %v364
    %871 = vmatprep.subr.mxu0 0.0
    %872 = vmatpush2.msra.mxu0 %v363
    %873 = vmatprep.subr.mxu0 0.0
    %874 = vmatpush2.msra.mxu0 %v362
    %875 = vmatprep.subr.mxu0 0.0
    %876 = vmatpush2.msra.mxu0 %v361
    %877 = vmatprep.subr.mxu0 0.0
    %878 = vmatpush2.msra.mxu0 %v360
    %879 = vmatprep.subr.mxu0 0.0
    %880 = vmatpush2.msra.mxu0 %v359
    %881 = vmatprep.subr.mxu0 0.0
    %882 = vmatpush2.msra.mxu0 %v358
    %883 = vmatprep.subr.mxu0 0.0
    %884 = vmatpush2.msra.mxu0 %v357
    %885 = vmatprep.mubr.f32.mxu0 %v818
    %886 = vmatmul.mubr.f32.gmra.mxu0 %v817
    %v887 = vpop.f32.mrf.mxu0
    %v888 = vadd.f32 %v791, %v887
    %v889 = vpop.f32.mrf.mxu0
    %890 = vdwg.mxu0
    %s891 = scalar_lea.vmem %s1, 4
    %v892 = vld [vmem:[%s891] sm:$0x3]
    %v894 = vlaneseq
    %v895 = vshrl.u32 %v894, 7
    %v896 = vsub.s32 0, %v895
    %v897 = vrot.slane %v892, %v896
    %v898 = vlaneseq
    %v899 = vshrl.u32 %v898, 7
    %v900 = vsub.s32 1, %v899
    %v901 = vrot.slane %v892, %v900
    %v902 = vcombine.low %v897, %v901
    %v904 = vunpack.c.l.s4 1983009808
    %v905 = vunpack.c.0.s8 %v904
    %v906 = vlaneseq
    %v907 = vshrl.u32 %v906, 7
    %v908 = vsub.s32 %v905, %v907
    %v909 = vrot.slane %v902, %v908
    %910 = vrot.lane.b32.xlu0 %v909, 111
    %v911 = vpop.permute.xlu0 %910
    %v912 = vrot.slane %v911, 6
    %v913 = vsel %vm60, %v912, %v911
    %v915 = vmul.f32 %v36, %v913
    %v916 = vadd.f32 %v915, 0.0
    %s917 = scalar_lea.vmem %s1, 12
    %v918 = vld [vmem:[%s917] sm:$0x3]
    %v920 = vlaneseq
    %v921 = vshrl.u32 %v920, 7
    %v922 = vsub.s32 0, %v921
    %v923 = vrot.slane %v918, %v922
    %v924 = vlaneseq
    %v925 = vshrl.u32 %v924, 7
    %v926 = vsub.s32 1, %v925
    %v927 = vrot.slane %v918, %v926
    %v928 = vcombine.low %v923, %v927
    %v930 = vunpack.c.l.s4 1983009808
    %v931 = vunpack.c.0.s8 %v930
    %v932 = vlaneseq
    %v933 = vshrl.u32 %v932, 7
    %v934 = vsub.s32 %v931, %v933
    %v935 = vrot.slane %v928, %v934
    %936 = vrot.lane.b32.xlu0 %v935, 112
    %v937 = vpop.permute.xlu0 %936
    %v938 = vrot.slane %v937, 6
    %v939 = vsel %vm87, %v938, %v937
    %v941 = vmul.f32 %v36, %v939
    %943 = vrot.lane.b32.xlu0 %v941, 127
    %v944 = vpop.permute.xlu0 %943
    %v945 = vrot.slane %v944, 2
    %v946 = vsel %vm95, %v944, %v945
    %v948 = vadd.f32 %v916, %v946
    %s949 = scalar_lea.vmem %s1, 20
    %v950 = vld [vmem:[%s949] sm:$0x3]
    %v952 = vlaneseq
    %v953 = vshrl.u32 %v952, 7
    %v954 = vsub.s32 0, %v953
    %v955 = vrot.slane %v950, %v954
    %v956 = vlaneseq
    %v957 = vshrl.u32 %v956, 7
    %v958 = vsub.s32 1, %v957
    %v959 = vrot.slane %v950, %v958
    %v960 = vcombine.low %v955, %v959
    %v962 = vunpack.c.l.s4 1983009808
    %v963 = vunpack.c.0.s8 %v962
    %v964 = vlaneseq
    %v965 = vshrl.u32 %v964, 7
    %v966 = vsub.s32 %v963, %v965
    %v967 = vrot.slane %v960, %v966
    %968 = vrot.lane.b32.xlu0 %v967, 113
    %v969 = vpop.permute.xlu0 %968
    %v970 = vrot.slane %v969, 6
    %v971 = vsel %vm121, %v970, %v969
    %v973 = vmul.f32 %v36, %v971
    %975 = vrot.lane.b32.xlu0 %v973, 126
    %v976 = vpop.permute.xlu0 %975
    %v977 = vrot.slane %v976, 2
    %v978 = vsel %vm129, %v976, %v977
    %v980 = vadd.f32 %v948, %v978
    %s981 = scalar_lea.vmem %s1, 28
    %v982 = vld [vmem:[%s981] sm:$0x3]
    %v984 = vlaneseq
    %v985 = vshrl.u32 %v984, 7
    %v986 = vsub.s32 0, %v985
    %v987 = vrot.slane %v982, %v986
    %v988 = vlaneseq
    %v989 = vshrl.u32 %v988, 7
    %v990 = vsub.s32 1, %v989
    %v991 = vrot.slane %v982, %v990
    %v992 = vcombine.low %v987, %v991
    %v994 = vunpack.c.l.s4 1983009808
    %v995 = vunpack.c.0.s8 %v994
    %v996 = vlaneseq
    %v997 = vshrl.u32 %v996, 7
    %v998 = vsub.s32 %v995, %v997
    %v999 = vrot.slane %v992, %v998
    %1000 = vrot.lane.b32.xlu0 %v999, 127
    %v1001 = vpop.permute.xlu0 %1000
    %v1002 = vrot.slane %v1001, 6
    %v1003 = vsel %vm95, %v1002, %v1001
    %v1005 = vmul.f32 %v36, %v1003
    %1007 = vrot.lane.b32.xlu0 %v1005, 112
    %v1008 = vpop.permute.xlu0 %1007
    %v1009 = vrot.slane %v1008, 2
    %v1010 = vsel %vm87, %v1008, %v1009
    %v1012 = vadd.f32 %v980, %v1010
    %s1013 = scalar_lea.vmem %s1, 36
    %v1014 = vld [vmem:[%s1013] sm:$0x3]
    %v1016 = vlaneseq
    %v1017 = vshrl.u32 %v1016, 7
    %v1018 = vsub.s32 0, %v1017
    %v1019 = vrot.slane %v1014, %v1018
    %v1020 = vlaneseq
    %v1021 = vshrl.u32 %v1020, 7
    %v1022 = vsub.s32 1, %v1021
    %v1023 = vrot.slane %v1014, %v1022
    %v1024 = vcombine.low %v1019, %v1023
    %v1026 = vunpack.c.l.s4 1983009808
    %v1027 = vunpack.c.0.s8 %v1026
    %v1028 = vlaneseq
    %v1029 = vshrl.u32 %v1028, 7
    %v1030 = vsub.s32 %v1027, %v1029
    %v1031 = vrot.slane %v1024, %v1030
    %v1033 = vmul.f32 %v37, %v1031
    %1035 = vrot.lane.b32.xlu0 %v1033, 111
    %v1036 = vpop.permute.xlu0 %1035
    %v1037 = vrot.slane %v1036, 6
    %v1038 = vsel %vm60, %v1037, %v1036
    %v1040 = vadd.f32 %v1012, %v1038
    %s1041 = scalar_lea.vmem %s1, 44
    %v1042 = vld [vmem:[%s1041] sm:$0x3]
    %v1044 = vlaneseq
    %v1045 = vshrl.u32 %v1044, 7
    %v1046 = vsub.s32 0, %v1045
    %v1047 = vrot.slane %v1042, %v1046
    %v1048 = vlaneseq
    %v1049 = vshrl.u32 %v1048, 7
    %v1050 = vsub.s32 1, %v1049
    %v1051 = vrot.slane %v1042, %v1050
    %v1052 = vcombine.low %v1047, %v1051
    %v1054 = vunpack.c.l.s4 1983009808
    %v1055 = vunpack.c.0.s8 %v1054
    %v1056 = vlaneseq
    %v1057 = vshrl.u32 %v1056, 7
    %v1058 = vsub.s32 %v1055, %v1057
    %v1059 = vrot.slane %v1052, %v1058
    %1060 = vrot.lane.b32.xlu0 %v1059, 1
    %v1061 = vpop.permute.xlu0 %1060
    %v1062 = vrot.slane %v1061, 6
    %v1063 = vsel %vm215, %v1062, %v1061
    %v1065 = vmul.f32 %v38, %v1063
    %1067 = vrot.lane.b32.xlu0 %v1065, 110
    %v1068 = vpop.permute.xlu0 %1067
    %v1069 = vrot.slane %v1068, 6
    %v1070 = vsel %vm223, %v1069, %v1068
    %v1072 = vadd.f32 %v1040, %v1070
    %s1073 = scalar_lea.vmem %s1, 52
    %v1074 = vld [vmem:[%s1073] sm:$0x3]
    %v1076 = vlaneseq
    %v1077 = vshrl.u32 %v1076, 7
    %v1078 = vsub.s32 0, %v1077
    %v1079 = vrot.slane %v1074, %v1078
    %v1080 = vlaneseq
    %v1081 = vshrl.u32 %v1080, 7
    %v1082 = vsub.s32 1, %v1081
    %v1083 = vrot.slane %v1074, %v1082
    %v1084 = vcombine.low %v1079, %v1083
    %v1086 = vunpack.c.l.s4 1983009808
    %v1087 = vunpack.c.0.s8 %v1086
    %v1088 = vlaneseq
    %v1089 = vshrl.u32 %v1088, 7
    %v1090 = vsub.s32 %v1087, %v1089
    %v1091 = vrot.slane %v1084, %v1090
    %1092 = vrot.lane.b32.xlu0 %v1091, 15
    %v1093 = vpop.permute.xlu0 %1092
    %v1094 = vrot.slane %v1093, 6
    %v1095 = vsel %vm249, %v1094, %v1093
    %v1097 = vmul.f32 %v38, %v1095
    %1099 = vrot.lane.b32.xlu0 %v1097, 96
    %v1100 = vpop.permute.xlu0 %1099
    %v1101 = vrot.slane %v1100, 6
    %v1102 = vsel %vm257, %v1101, %v1100
    %v1104 = vadd.f32 %v1072, %v1102
    %s1105 = scalar_lea.vmem %s1, 60
    %v1106 = vld [vmem:[%s1105] sm:$0x3]
    %v1108 = vlaneseq
    %v1109 = vshrl.u32 %v1108, 7
    %v1110 = vsub.s32 0, %v1109
    %v1111 = vrot.slane %v1106, %v1110
    %v1112 = vlaneseq
    %v1113 = vshrl.u32 %v1112, 7
    %v1114 = vsub.s32 1, %v1113
    %v1115 = vrot.slane %v1106, %v1114
    %v1116 = vcombine.low %v1111, %v1115
    %v1118 = vunpack.c.l.s4 1983009808
    %v1119 = vunpack.c.0.s8 %v1118
    %v1120 = vlaneseq
    %v1121 = vshrl.u32 %v1120, 7
    %v1122 = vsub.s32 %v1119, %v1121
    %v1123 = vrot.slane %v1116, %v1122
    %1124 = vrot.lane.b32.xlu0 %v1123, 16
    %v1125 = vpop.permute.xlu0 %1124
    %v1126 = vrot.slane %v1125, 6
    %v1127 = vsel %vm283, %v1126, %v1125
    %v1129 = vmul.f32 %v38, %v1127
    %1131 = vrot.lane.b32.xlu0 %v1129, 95
    %v1132 = vpop.permute.xlu0 %1131
    %v1133 = vrot.slane %v1132, 6
    %v1134 = vsel %vm291, %v1133, %v1132
    %v1136 = vadd.f32 %v1104, %v1134
    %s1137 = scalar_lea.vmem %s1, 68
    %v1138 = vld [vmem:[%s1137] sm:$0x3]
    %v1140 = vlaneseq
    %v1141 = vshrl.u32 %v1140, 7
    %v1142 = vsub.s32 0, %v1141
    %v1143 = vrot.slane %v1138, %v1142
    %v1144 = vlaneseq
    %v1145 = vshrl.u32 %v1144, 7
    %v1146 = vsub.s32 1, %v1145
    %v1147 = vrot.slane %v1138, %v1146
    %v1148 = vcombine.low %v1143, %v1147
    %v1150 = vunpack.c.l.s4 1983009808
    %v1151 = vunpack.c.0.s8 %v1150
    %v1152 = vlaneseq
    %v1153 = vshrl.u32 %v1152, 7
    %v1154 = vsub.s32 %v1151, %v1153
    %v1155 = vrot.slane %v1148, %v1154
    %1156 = vrot.lane.b32.xlu0 %v1155, 17
    %v1157 = vpop.permute.xlu0 %1156
    %v1158 = vrot.slane %v1157, 6
    %v1159 = vsel %vm317, %v1158, %v1157
    %v1161 = vmul.f32 %v38, %v1159
    %1163 = vrot.lane.b32.xlu0 %v1161, 94
    %v1164 = vpop.permute.xlu0 %1163
    %v1165 = vrot.slane %v1164, 6
    %v1166 = vsel %vm325, %v1165, %v1164
    %v1168 = vadd.f32 %v1136, %v1166
    %s1169 = scalar_lea.vmem %s2, 2
    %v1170 = vld [vmem:[%s1169] sm:$0x1]
    %v1172 = vlaneseq
    %v1173 = vshrl.u32 %v1172, 7
    %v1174 = vsub.s32 0, %v1173
    %v1175 = vrot.slane %v1170, %v1174
    %1176 = vset.pattern.permute.xlu0 0
    %1177 = vperm.xlu0 %1176, %v1175
    %v1178 = vpop.permute.xlu0 %1177
    %v1180 = vadd.f32 %v1168, %v1178
    %v1181 = vmax.f32 %v1180, 0.0
    %s1182 = scalar_lea.vmem %s3, 512
    %v1183 = vld [vmem:[%s1182] sm:$0xff]
    %v1184 = vld [vmem:[%s1182 + $0x8] sm:$0xff]
    %v1185 = vld [vmem:[%s1182 + $0x10] sm:$0xff]
    %v1186 = vld [vmem:[%s1182 + $0x18] sm:$0xff]
    %v1187 = vld [vmem:[%s1182 + $0x20] sm:$0xff]
    %v1188 = vld [vmem:[%s1182 + $0x28] sm:$0xff]
    %v1189 = vld [vmem:[%s1182 + $0x30] sm:$0xff]
    %v1190 = vld [vmem:[%s1182 + $0x38] sm:$0xff]
    %v1191 = vld [vmem:[%s1182 + $0x40] sm:$0xff]
    %v1192 = vld [vmem:[%s1182 + $0x48] sm:$0xff]
    %v1193 = vld [vmem:[%s1182 + $0x50] sm:$0xff]
    %v1194 = vld [vmem:[%s1182 + $0x58] sm:$0xff]
    %v1195 = vld [vmem:[%s1182 + $0x60] sm:$0xff]
    %v1196 = vld [vmem:[%s1182 + $0x68] sm:$0xff]
    %v1197 = vld [vmem:[%s1182 + $0x70] sm:$0xff]
    %v1198 = vld [vmem:[%s1182 + $0x78] sm:$0xff]
    %v1199 = vld [vmem:[%s1182 + $0x80] sm:$0xff]
    %v1200 = vld [vmem:[%s1182 + $0x88] sm:$0xff]
    %v1201 = vld [vmem:[%s1182 + $0x90] sm:$0xff]
    %v1202 = vld [vmem:[%s1182 + $0x98] sm:$0xff]
    %v1203 = vld [vmem:[%s1182 + $0xa0] sm:$0xff]
    %v1204 = vld [vmem:[%s1182 + $0xa8] sm:$0xff]
    %v1205 = vld [vmem:[%s1182 + $0xb0] sm:$0xff]
    %v1206 = vld [vmem:[%s1182 + $0xb8] sm:$0xff]
    %v1207 = vld [vmem:[%s1182 + $0xc0] sm:$0xff]
    %v1208 = vld [vmem:[%s1182 + $0xc8] sm:$0xff]
    %v1209 = vld [vmem:[%s1182 + $0xd0] sm:$0xff]
    %v1210 = vld [vmem:[%s1182 + $0xd8] sm:$0xff]
    %v1211 = vld [vmem:[%s1182 + $0xe0] sm:$0xff]
    %v1212 = vld [vmem:[%s1182 + $0xe8] sm:$0xff]
    %v1213 = vld [vmem:[%s1182 + $0xf0] sm:$0xff]
    %v1214 = vld [vmem:[%s1182 + $0xf8] sm:$0xff]
    %v1216 = vcombine.high %v1181, %v1181
    %v1218 = vunpack.c.l.s4 1983009808
    %v1219 = vunpack.c.0.s8 %v1218
    %v1220 = vlaneseq
    %v1221 = vshrl.u32 %v1220, 7
    %v1222 = vsub.s32 %v1219, %v1221
    %v1223 = vrot.slane %v1181, %v1222
    %v1225 = vunpack.c.l.s4 1983009808
    %v1226 = vunpack.c.0.s8 %v1225
    %v1227 = vlaneseq
    %v1228 = vshrl.u32 %v1227, 7
    %v1229 = vsub.s32 %v1226, %v1228
    %v1230 = vrot.slane %v1216, %v1229
    %v1231 = vcombine.high %v1223, %v1223
    %1232 = vrot.lane.b32.xlu0 %v1223, 17
    %v1233 = vpop.permute.xlu0 %1232
    %1234 = vrot.lane.b32.xlu0 %v1231, 17
    %v1235 = vpop.permute.xlu0 %1234
    %1236 = vrot.lane.b32.xlu0 %v1230, 17
    %v1237 = vpop.permute.xlu0 %1236
    %v1238 = vsel %vm317, %v1233, %v1235
    %v1239 = vsel %vm317, %v1235, %v1237
    %1242 = vmatprep.subr.mxu0 0.0
    %1243 = vmatpush1.msra.mxu0 %v1198
    %1244 = vmatprep.subr.mxu0 0.0
    %1245 = vmatpush1.msra.mxu0 %v1197
    %1246 = vmatprep.subr.mxu0 0.0
    %1247 = vmatpush1.msra.mxu0 %v1196
    %1248 = vmatprep.subr.mxu0 0.0
    %1249 = vmatpush1.msra.mxu0 %v1195
    %1250 = vmatprep.subr.mxu0 0.0
    %1251 = vmatpush1.msra.mxu0 %v1194
    %1252 = vmatprep.subr.mxu0 0.0
    %1253 = vmatpush1.msra.mxu0 %v1193
    %1254 = vmatprep.subr.mxu0 0.0
    %1255 = vmatpush1.msra.mxu0 %v1192
    %1256 = vmatprep.subr.mxu0 0.0
    %1257 = vmatpush1.msra.mxu0 %v1191
    %1258 = vmatprep.subr.mxu0 0.0
    %1259 = vmatpush1.msra.mxu0 %v1190
    %1260 = vmatprep.subr.mxu0 0.0
    %1261 = vmatpush1.msra.mxu0 %v1189
    %1262 = vmatprep.subr.mxu0 0.0
    %1263 = vmatpush1.msra.mxu0 %v1188
    %1264 = vmatprep.subr.mxu0 0.0
    %1265 = vmatpush1.msra.mxu0 %v1187
    %1266 = vmatprep.subr.mxu0 0.0
    %1267 = vmatpush1.msra.mxu0 %v1186
    %1268 = vmatprep.subr.mxu0 0.0
    %1269 = vmatpush1.msra.mxu0 %v1185
    %1270 = vmatprep.subr.mxu0 0.0
    %1271 = vmatpush1.msra.mxu0 %v1184
    %1272 = vmatprep.subr.mxu0 0.0
    %1273 = vmatpush1.msra.mxu0 %v1183
    %1274 = vmatprep.subr.mxu0 0.0
    %1275 = vmatpush2.msra.mxu0 %v1214
    %1276 = vmatprep.subr.mxu0 0.0
    %1277 = vmatpush2.msra.mxu0 %v1213
    %1278 = vmatprep.subr.mxu0 0.0
    %1279 = vmatpush2.msra.mxu0 %v1212
    %1280 = vmatprep.subr.mxu0 0.0
    %1281 = vmatpush2.msra.mxu0 %v1211
    %1282 = vmatprep.subr.mxu0 0.0
    %1283 = vmatpush2.msra.mxu0 %v1210
    %1284 = vmatprep.subr.mxu0 0.0
    %1285 = vmatpush2.msra.mxu0 %v1209
    %1286 = vmatprep.subr.mxu0 0.0
    %1287 = vmatpush2.msra.mxu0 %v1208
    %1288 = vmatprep.subr.mxu0 0.0
    %1289 = vmatpush2.msra.mxu0 %v1207
    %1290 = vmatprep.subr.mxu0 0.0
    %1291 = vmatpush2.msra.mxu0 %v1206
    %1292 = vmatprep.subr.mxu0 0.0
    %1293 = vmatpush2.msra.mxu0 %v1205
    %1294 = vmatprep.subr.mxu0 0.0
    %1295 = vmatpush2.msra.mxu0 %v1204
    %1296 = vmatprep.subr.mxu0 0.0
    %1297 = vmatpush2.msra.mxu0 %v1203
    %1298 = vmatprep.subr.mxu0 0.0
    %1299 = vmatpush2.msra.mxu0 %v1202
    %1300 = vmatprep.subr.mxu0 0.0
    %1301 = vmatpush2.msra.mxu0 %v1201
    %1302 = vmatprep.subr.mxu0 0.0
    %1303 = vmatpush2.msra.mxu0 %v1200
    %1304 = vmatprep.subr.mxu0 0.0
    %1305 = vmatpush2.msra.mxu0 %v1199
    %1306 = vmatprep.mubr.f32.mxu0 %v1239
    %1307 = vmatmul.mubr.f32.gmra.mxu0 %v1238
    %v1308 = vpop.f32.mrf.mxu0
    %v1309 = vadd.f32 0.0, %v1308
    %v1310 = vpop.f32.mrf.mxu0
    %1311 = vdwg.mxu0
    %v1312 = vadd.f32 %v888, %v1309
    %s1313 = scalar_lea.vmem %s1, 6
    %v1314 = vld [vmem:[%s1313] sm:$0x3]
    %v1316 = vlaneseq
    %v1317 = vshrl.u32 %v1316, 7
    %v1318 = vsub.s32 0, %v1317
    %v1319 = vrot.slane %v1314, %v1318
    %v1320 = vlaneseq
    %v1321 = vshrl.u32 %v1320, 7
    %v1322 = vsub.s32 1, %v1321
    %v1323 = vrot.slane %v1314, %v1322
    %v1324 = vcombine.low %v1319, %v1323
    %v1326 = vunpack.c.l.s4 1983009808
    %v1327 = vunpack.c.0.s8 %v1326
    %v1328 = vlaneseq
    %v1329 = vshrl.u32 %v1328, 7
    %v1330 = vsub.s32 %v1327, %v1329
    %v1331 = vrot.slane %v1324, %v1330
    %1332 = vrot.lane.b32.xlu0 %v1331, 111
    %v1333 = vpop.permute.xlu0 %1332
    %v1334 = vrot.slane %v1333, 6
    %v1335 = vsel %vm60, %v1334, %v1333
    %v1337 = vmul.f32 %v36, %v1335
    %v1338 = vadd.f32 %v1337, 0.0
    %s1339 = scalar_lea.vmem %s1, 14
    %v1340 = vld [vmem:[%s1339] sm:$0x3]
    %v1342 = vlaneseq
    %v1343 = vshrl.u32 %v1342, 7
    %v1344 = vsub.s32 0, %v1343
    %v1345 = vrot.slane %v1340, %v1344
    %v1346 = vlaneseq
    %v1347 = vshrl.u32 %v1346, 7
    %v1348 = vsub.s32 1, %v1347
    %v1349 = vrot.slane %v1340, %v1348
    %v1350 = vcombine.low %v1345, %v1349
    %v1352 = vunpack.c.l.s4 1983009808
    %v1353 = vunpack.c.0.s8 %v1352
    %v1354 = vlaneseq
    %v1355 = vshrl.u32 %v1354, 7
    %v1356 = vsub.s32 %v1353, %v1355
    %v1357 = vrot.slane %v1350, %v1356
    %1358 = vrot.lane.b32.xlu0 %v1357, 112
    %v1359 = vpop.permute.xlu0 %1358
    %v1360 = vrot.slane %v1359, 6
    %v1361 = vsel %vm87, %v1360, %v1359
    %v1363 = vmul.f32 %v36, %v1361
    %1365 = vrot.lane.b32.xlu0 %v1363, 127
    %v1366 = vpop.permute.xlu0 %1365
    %v1367 = vrot.slane %v1366, 2
    %v1368 = vsel %vm95, %v1366, %v1367
    %v1370 = vadd.f32 %v1338, %v1368
    %s1371 = scalar_lea.vmem %s1, 22
    %v1372 = vld [vmem:[%s1371] sm:$0x3]
    %v1374 = vlaneseq
    %v1375 = vshrl.u32 %v1374, 7
    %v1376 = vsub.s32 0, %v1375
    %v1377 = vrot.slane %v1372, %v1376
    %v1378 = vlaneseq
    %v1379 = vshrl.u32 %v1378, 7
    %v1380 = vsub.s32 1, %v1379
    %v1381 = vrot.slane %v1372, %v1380
    %v1382 = vcombine.low %v1377, %v1381
    %v1384 = vunpack.c.l.s4 1983009808
    %v1385 = vunpack.c.0.s8 %v1384
    %v1386 = vlaneseq
    %v1387 = vshrl.u32 %v1386, 7
    %v1388 = vsub.s32 %v1385, %v1387
    %v1389 = vrot.slane %v1382, %v1388
    %1390 = vrot.lane.b32.xlu0 %v1389, 113
    %v1391 = vpop.permute.xlu0 %1390
    %v1392 = vrot.slane %v1391, 6
    %v1393 = vsel %vm121, %v1392, %v1391
    %v1395 = vmul.f32 %v36, %v1393
    %1397 = vrot.lane.b32.xlu0 %v1395, 126
    %v1398 = vpop.permute.xlu0 %1397
    %v1399 = vrot.slane %v1398, 2
    %v1400 = vsel %vm129, %v1398, %v1399
    %v1402 = vadd.f32 %v1370, %v1400
    %s1403 = scalar_lea.vmem %s1, 30
    %v1404 = vld [vmem:[%s1403] sm:$0x3]
    %v1406 = vlaneseq
    %v1407 = vshrl.u32 %v1406, 7
    %v1408 = vsub.s32 0, %v1407
    %v1409 = vrot.slane %v1404, %v1408
    %v1410 = vlaneseq
    %v1411 = vshrl.u32 %v1410, 7
    %v1412 = vsub.s32 1, %v1411
    %v1413 = vrot.slane %v1404, %v1412
    %v1414 = vcombine.low %v1409, %v1413
    %v1416 = vunpack.c.l.s4 1983009808
    %v1417 = vunpack.c.0.s8 %v1416
    %v1418 = vlaneseq
    %v1419 = vshrl.u32 %v1418, 7
    %v1420 = vsub.s32 %v1417, %v1419
    %v1421 = vrot.slane %v1414, %v1420
    %1422 = vrot.lane.b32.xlu0 %v1421, 127
    %v1423 = vpop.permute.xlu0 %1422
    %v1424 = vrot.slane %v1423, 6
    %v1425 = vsel %vm95, %v1424, %v1423
    %v1427 = vmul.f32 %v36, %v1425
    %1429 = vrot.lane.b32.xlu0 %v1427, 112
    %v1430 = vpop.permute.xlu0 %1429
    %v1431 = vrot.slane %v1430, 2
    %v1432 = vsel %vm87, %v1430, %v1431
    %v1434 = vadd.f32 %v1402, %v1432
    %s1435 = scalar_lea.vmem %s1, 38
    %v1436 = vld [vmem:[%s1435] sm:$0x3]
    %v1438 = vlaneseq
    %v1439 = vshrl.u32 %v1438, 7
    %v1440 = vsub.s32 0, %v1439
    %v1441 = vrot.slane %v1436, %v1440
    %v1442 = vlaneseq
    %v1443 = vshrl.u32 %v1442, 7
    %v1444 = vsub.s32 1, %v1443
    %v1445 = vrot.slane %v1436, %v1444
    %v1446 = vcombine.low %v1441, %v1445
    %v1448 = vunpack.c.l.s4 1983009808
    %v1449 = vunpack.c.0.s8 %v1448
    %v1450 = vlaneseq
    %v1451 = vshrl.u32 %v1450, 7
    %v1452 = vsub.s32 %v1449, %v1451
    %v1453 = vrot.slane %v1446, %v1452
    %v1455 = vmul.f32 %v37, %v1453
    %1457 = vrot.lane.b32.xlu0 %v1455, 111
    %v1458 = vpop.permute.xlu0 %1457
    %v1459 = vrot.slane %v1458, 6
    %v1460 = vsel %vm60, %v1459, %v1458
    %v1462 = vadd.f32 %v1434, %v1460
    %s1463 = scalar_lea.vmem %s1, 46
    %v1464 = vld [vmem:[%s1463] sm:$0x3]
    %v1466 = vlaneseq
    %v1467 = vshrl.u32 %v1466, 7
    %v1468 = vsub.s32 0, %v1467
    %v1469 = vrot.slane %v1464, %v1468
    %v1470 = vlaneseq
    %v1471 = vshrl.u32 %v1470, 7
    %v1472 = vsub.s32 1, %v1471
    %v1473 = vrot.slane %v1464, %v1472
    %v1474 = vcombine.low %v1469, %v1473
    %v1476 = vunpack.c.l.s4 1983009808
    %v1477 = vunpack.c.0.s8 %v1476
    %v1478 = vlaneseq
    %v1479 = vshrl.u32 %v1478, 7
    %v1480 = vsub.s32 %v1477, %v1479
    %v1481 = vrot.slane %v1474, %v1480
    %1482 = vrot.lane.b32.xlu0 %v1481, 1
    %v1483 = vpop.permute.xlu0 %1482
    %v1484 = vrot.slane %v1483, 6
    %v1485 = vsel %vm215, %v1484, %v1483
    %v1487 = vmul.f32 %v38, %v1485
    %1489 = vrot.lane.b32.xlu0 %v1487, 110
    %v1490 = vpop.permute.xlu0 %1489
    %v1491 = vrot.slane %v1490, 6
    %v1492 = vsel %vm223, %v1491, %v1490
    %v1494 = vadd.f32 %v1462, %v1492
    %s1495 = scalar_lea.vmem %s1, 54
    %v1496 = vld [vmem:[%s1495] sm:$0x3]
    %v1498 = vlaneseq
    %v1499 = vshrl.u32 %v1498, 7
    %v1500 = vsub.s32 0, %v1499
    %v1501 = vrot.slane %v1496, %v1500
    %v1502 = vlaneseq
    %v1503 = vshrl.u32 %v1502, 7
    %v1504 = vsub.s32 1, %v1503
    %v1505 = vrot.slane %v1496, %v1504
    %v1506 = vcombine.low %v1501, %v1505
    %v1508 = vunpack.c.l.s4 1983009808
    %v1509 = vunpack.c.0.s8 %v1508
    %v1510 = vlaneseq
    %v1511 = vshrl.u32 %v1510, 7
    %v1512 = vsub.s32 %v1509, %v1511
    %v1513 = vrot.slane %v1506, %v1512
    %1514 = vrot.lane.b32.xlu0 %v1513, 15
    %v1515 = vpop.permute.xlu0 %1514
    %v1516 = vrot.slane %v1515, 6
    %v1517 = vsel %vm249, %v1516, %v1515
    %v1519 = vmul.f32 %v38, %v1517
    %1521 = vrot.lane.b32.xlu0 %v1519, 96
    %v1522 = vpop.permute.xlu0 %1521
    %v1523 = vrot.slane %v1522, 6
    %v1524 = vsel %vm257, %v1523, %v1522
    %v1526 = vadd.f32 %v1494, %v1524
    %s1527 = scalar_lea.vmem %s1, 62
    %v1528 = vld [vmem:[%s1527] sm:$0x3]
    %v1530 = vlaneseq
    %v1531 = vshrl.u32 %v1530, 7
    %v1532 = vsub.s32 0, %v1531
    %v1533 = vrot.slane %v1528, %v1532
    %v1534 = vlaneseq
    %v1535 = vshrl.u32 %v1534, 7
    %v1536 = vsub.s32 1, %v1535
    %v1537 = vrot.slane %v1528, %v1536
    %v1538 = vcombine.low %v1533, %v1537
    %v1540 = vunpack.c.l.s4 1983009808
    %v1541 = vunpack.c.0.s8 %v1540
    %v1542 = vlaneseq
    %v1543 = vshrl.u32 %v1542, 7
    %v1544 = vsub.s32 %v1541, %v1543
    %v1545 = vrot.slane %v1538, %v1544
    %1546 = vrot.lane.b32.xlu0 %v1545, 16
    %v1547 = vpop.permute.xlu0 %1546
    %v1548 = vrot.slane %v1547, 6
    %v1549 = vsel %vm283, %v1548, %v1547
    %v1551 = vmul.f32 %v38, %v1549
    %1553 = vrot.lane.b32.xlu0 %v1551, 95
    %v1554 = vpop.permute.xlu0 %1553
    %v1555 = vrot.slane %v1554, 6
    %v1556 = vsel %vm291, %v1555, %v1554
    %v1558 = vadd.f32 %v1526, %v1556
    %s1559 = scalar_lea.vmem %s1, 70
    %v1560 = vld [vmem:[%s1559] sm:$0x3]
    %v1562 = vlaneseq
    %v1563 = vshrl.u32 %v1562, 7
    %v1564 = vsub.s32 0, %v1563
    %v1565 = vrot.slane %v1560, %v1564
    %v1566 = vlaneseq
    %v1567 = vshrl.u32 %v1566, 7
    %v1568 = vsub.s32 1, %v1567
    %v1569 = vrot.slane %v1560, %v1568
    %v1570 = vcombine.low %v1565, %v1569
    %v1572 = vunpack.c.l.s4 1983009808
    %v1573 = vunpack.c.0.s8 %v1572
    %v1574 = vlaneseq
    %v1575 = vshrl.u32 %v1574, 7
    %v1576 = vsub.s32 %v1573, %v1575
    %v1577 = vrot.slane %v1570, %v1576
    %1578 = vrot.lane.b32.xlu0 %v1577, 17
    %v1579 = vpop.permute.xlu0 %1578
    %v1580 = vrot.slane %v1579, 6
    %v1581 = vsel %vm317, %v1580, %v1579
    %v1583 = vmul.f32 %v38, %v1581
    %1585 = vrot.lane.b32.xlu0 %v1583, 94
    %v1586 = vpop.permute.xlu0 %1585
    %v1587 = vrot.slane %v1586, 6
    %v1588 = vsel %vm325, %v1587, %v1586
    %v1590 = vadd.f32 %v1558, %v1588
    %s1591 = scalar_lea.vmem %s2, 3
    %v1592 = vld [vmem:[%s1591] sm:$0x1]
    %v1594 = vlaneseq
    %v1595 = vshrl.u32 %v1594, 7
    %v1596 = vsub.s32 0, %v1595
    %v1597 = vrot.slane %v1592, %v1596
    %1598 = vset.pattern.permute.xlu0 0
    %1599 = vperm.xlu0 %1598, %v1597
    %v1600 = vpop.permute.xlu0 %1599
    %v1602 = vadd.f32 %v1590, %v1600
    %v1603 = vmax.f32 %v1602, 0.0
    %s1604 = scalar_lea.vmem %s3, 768
    %v1605 = vld [vmem:[%s1604] sm:$0xff]
    %v1606 = vld [vmem:[%s1604 + $0x8] sm:$0xff]
    %v1607 = vld [vmem:[%s1604 + $0x10] sm:$0xff]
    %v1608 = vld [vmem:[%s1604 + $0x18] sm:$0xff]
    %v1609 = vld [vmem:[%s1604 + $0x20] sm:$0xff]
    %v1610 = vld [vmem:[%s1604 + $0x28] sm:$0xff]
    %v1611 = vld [vmem:[%s1604 + $0x30] sm:$0xff]
    %v1612 = vld [vmem:[%s1604 + $0x38] sm:$0xff]
    %v1613 = vld [vmem:[%s1604 + $0x40] sm:$0xff]
    %v1614 = vld [vmem:[%s1604 + $0x48] sm:$0xff]
    %v1615 = vld [vmem:[%s1604 + $0x50] sm:$0xff]
    %v1616 = vld [vmem:[%s1604 + $0x58] sm:$0xff]
    %v1617 = vld [vmem:[%s1604 + $0x60] sm:$0xff]
    %v1618 = vld [vmem:[%s1604 + $0x68] sm:$0xff]
    %v1619 = vld [vmem:[%s1604 + $0x70] sm:$0xff]
    %v1620 = vld [vmem:[%s1604 + $0x78] sm:$0xff]
    %v1621 = vld [vmem:[%s1604 + $0x80] sm:$0xff]
    %v1622 = vld [vmem:[%s1604 + $0x88] sm:$0xff]
    %v1623 = vld [vmem:[%s1604 + $0x90] sm:$0xff]
    %v1624 = vld [vmem:[%s1604 + $0x98] sm:$0xff]
    %v1625 = vld [vmem:[%s1604 + $0xa0] sm:$0xff]
    %v1626 = vld [vmem:[%s1604 + $0xa8] sm:$0xff]
    %v1627 = vld [vmem:[%s1604 + $0xb0] sm:$0xff]
    %v1628 = vld [vmem:[%s1604 + $0xb8] sm:$0xff]
    %v1629 = vld [vmem:[%s1604 + $0xc0] sm:$0xff]
    %v1630 = vld [vmem:[%s1604 + $0xc8] sm:$0xff]
    %v1631 = vld [vmem:[%s1604 + $0xd0] sm:$0xff]
    %v1632 = vld [vmem:[%s1604 + $0xd8] sm:$0xff]
    %v1633 = vld [vmem:[%s1604 + $0xe0] sm:$0xff]
    %v1634 = vld [vmem:[%s1604 + $0xe8] sm:$0xff]
    %v1635 = vld [vmem:[%s1604 + $0xf0] sm:$0xff]
    %v1636 = vld [vmem:[%s1604 + $0xf8] sm:$0xff]
    %v1638 = vcombine.high %v1603, %v1603
    %v1640 = vunpack.c.l.s4 1983009808
    %v1641 = vunpack.c.0.s8 %v1640
    %v1642 = vlaneseq
    %v1643 = vshrl.u32 %v1642, 7
    %v1644 = vsub.s32 %v1641, %v1643
    %v1645 = vrot.slane %v1603, %v1644
    %v1647 = vunpack.c.l.s4 1983009808
    %v1648 = vunpack.c.0.s8 %v1647
    %v1649 = vlaneseq
    %v1650 = vshrl.u32 %v1649, 7
    %v1651 = vsub.s32 %v1648, %v1650
    %v1652 = vrot.slane %v1638, %v1651
    %v1653 = vcombine.high %v1645, %v1645
    %1654 = vrot.lane.b32.xlu0 %v1645, 17
    %v1655 = vpop.permute.xlu0 %1654
    %1656 = vrot.lane.b32.xlu0 %v1653, 17
    %v1657 = vpop.permute.xlu0 %1656
    %1658 = vrot.lane.b32.xlu0 %v1652, 17
    %v1659 = vpop.permute.xlu0 %1658
    %v1660 = vsel %vm317, %v1655, %v1657
    %v1661 = vsel %vm317, %v1657, %v1659
    %1664 = vmatprep.subr.mxu0 0.0
    %1665 = vmatpush1.msra.mxu0 %v1620
    %1666 = vmatprep.subr.mxu0 0.0
    %1667 = vmatpush1.msra.mxu0 %v1619
    %1668 = vmatprep.subr.mxu0 0.0
    %1669 = vmatpush1.msra.mxu0 %v1618
    %1670 = vmatprep.subr.mxu0 0.0
    %1671 = vmatpush1.msra.mxu0 %v1617
    %1672 = vmatprep.subr.mxu0 0.0
    %1673 = vmatpush1.msra.mxu0 %v1616
    %1674 = vmatprep.subr.mxu0 0.0
    %1675 = vmatpush1.msra.mxu0 %v1615
    %1676 = vmatprep.subr.mxu0 0.0
    %1677 = vmatpush1.msra.mxu0 %v1614
    %1678 = vmatprep.subr.mxu0 0.0
    %1679 = vmatpush1.msra.mxu0 %v1613
    %1680 = vmatprep.subr.mxu0 0.0
    %1681 = vmatpush1.msra.mxu0 %v1612
    %1682 = vmatprep.subr.mxu0 0.0
    %1683 = vmatpush1.msra.mxu0 %v1611
    %1684 = vmatprep.subr.mxu0 0.0
    %1685 = vmatpush1.msra.mxu0 %v1610
    %1686 = vmatprep.subr.mxu0 0.0
    %1687 = vmatpush1.msra.mxu0 %v1609
    %1688 = vmatprep.subr.mxu0 0.0
    %1689 = vmatpush1.msra.mxu0 %v1608
    %1690 = vmatprep.subr.mxu0 0.0
    %1691 = vmatpush1.msra.mxu0 %v1607
    %1692 = vmatprep.subr.mxu0 0.0
    %1693 = vmatpush1.msra.mxu0 %v1606
    %1694 = vmatprep.subr.mxu0 0.0
    %1695 = vmatpush1.msra.mxu0 %v1605
    %1696 = vmatprep.subr.mxu0 0.0
    %1697 = vmatpush2.msra.mxu0 %v1636
    %1698 = vmatprep.subr.mxu0 0.0
    %1699 = vmatpush2.msra.mxu0 %v1635
    %1700 = vmatprep.subr.mxu0 0.0
    %1701 = vmatpush2.msra.mxu0 %v1634
    %1702 = vmatprep.subr.mxu0 0.0
    %1703 = vmatpush2.msra.mxu0 %v1633
    %1704 = vmatprep.subr.mxu0 0.0
    %1705 = vmatpush2.msra.mxu0 %v1632
    %1706 = vmatprep.subr.mxu0 0.0
    %1707 = vmatpush2.msra.mxu0 %v1631
    %1708 = vmatprep.subr.mxu0 0.0
    %1709 = vmatpush2.msra.mxu0 %v1630
    %1710 = vmatprep.subr.mxu0 0.0
    %1711 = vmatpush2.msra.mxu0 %v1629
    %1712 = vmatprep.subr.mxu0 0.0
    %1713 = vmatpush2.msra.mxu0 %v1628
    %1714 = vmatprep.subr.mxu0 0.0
    %1715 = vmatpush2.msra.mxu0 %v1627
    %1716 = vmatprep.subr.mxu0 0.0
    %1717 = vmatpush2.msra.mxu0 %v1626
    %1718 = vmatprep.subr.mxu0 0.0
    %1719 = vmatpush2.msra.mxu0 %v1625
    %1720 = vmatprep.subr.mxu0 0.0
    %1721 = vmatpush2.msra.mxu0 %v1624
    %1722 = vmatprep.subr.mxu0 0.0
    %1723 = vmatpush2.msra.mxu0 %v1623
    %1724 = vmatprep.subr.mxu0 0.0
    %1725 = vmatpush2.msra.mxu0 %v1622
    %1726 = vmatprep.subr.mxu0 0.0
    %1727 = vmatpush2.msra.mxu0 %v1621
    %1728 = vmatprep.mubr.f32.mxu0 %v1661
    %1729 = vmatmul.mubr.f32.gmra.mxu0 %v1660
    %v1730 = vpop.f32.mrf.mxu0
    %v1731 = vadd.f32 0.0, %v1730
    %v1732 = vpop.f32.mrf.mxu0
    %1733 = vdwg.mxu0
    %v1734 = vadd.f32 %v1312, %v1731
    %v1735 = vld [vmem:[%s4] sm:$0x1]
    %v1737 = vlaneseq
    %v1738 = vshrl.u32 %v1737, 7
    %v1739 = vsub.s32 0, %v1738
    %v1740 = vrot.slane %v1735, %v1739
    %v1742 = vadd.f32 %v1734, %v1740
    %v1743 = vmax.f32 %v1742, 0.0
    %v1744 = vld [vmem:[%s5] sm:$0xff]
    %v1745 = vld [vmem:[%s5 + $0x8] sm:$0xff]
    %v1746 = vld [vmem:[%s5 + $0x10] sm:$0xff]
    %v1747 = vld [vmem:[%s5 + $0x18] sm:$0xff]
    %v1748 = vld [vmem:[%s6] sm:$0x1]
    %v1750 = vlaneseq
    %v1751 = vshrl.u32 %v1750, 7
    %v1752 = vsub.s32 0, %v1751
    %v1753 = vrot.slane %v1748, %v1752
    %vm1755 = vcmask 261120
    %v1757 = vsel %vm1755, %v1743, 0
    %1759 = vmatprep.subr.mxu0 0.0
    %1760 = vmatpush1.msra.mxu0 0.0
    %1761 = vmatprep.subr.mxu0 0.0
    %1762 = vmatpush1.msra.mxu0 0.0
    %1763 = vmatprep.subr.mxu0 0.0
    %1764 = vmatpush1.msra.mxu0 0.0
    %1765 = vmatprep.subr.mxu0 0.0
    %1766 = vmatpush1.msra.mxu0 0.0
    %1767 = vmatprep.subr.mxu0 0.0
    %1768 = vmatpush1.msra.mxu0 0.0
    %1769 = vmatprep.subr.mxu0 0.0
    %1770 = vmatpush1.msra.mxu0 0.0
    %1771 = vmatprep.subr.mxu0 0.0
    %1772 = vmatpush1.msra.mxu0 0.0
    %1773 = vmatprep.subr.mxu0 0.0
    %1774 = vmatpush1.msra.mxu0 0.0
    %1775 = vmatprep.subr.mxu0 0.0
    %1776 = vmatpush1.msra.mxu0 0.0
    %1777 = vmatprep.subr.mxu0 0.0
    %1778 = vmatpush1.msra.mxu0 0.0
    %1779 = vmatprep.subr.mxu0 0.0
    %1780 = vmatpush1.msra.mxu0 0.0
    %1781 = vmatprep.subr.mxu0 0.0
    %1782 = vmatpush1.msra.mxu0 0.0
    %1783 = vmatprep.subr.mxu0 0.0
    %1784 = vmatpush1.msra.mxu0 %v1747
    %1785 = vmatprep.subr.mxu0 0.0
    %1786 = vmatpush1.msra.mxu0 %v1746
    %1787 = vmatprep.subr.mxu0 0.0
    %1788 = vmatpush1.msra.mxu0 %v1745
    %1789 = vmatprep.subr.mxu0 0.0
    %1790 = vmatpush1.msra.mxu0 %v1744
    %1791 = vmatprep.subr.mxu0 0.0
    %1792 = vmatpush2.msra.mxu0 0.0
    %1793 = vmatprep.subr.mxu0 0.0
    %1794 = vmatpush2.msra.mxu0 0.0
    %1795 = vmatprep.subr.mxu0 0.0
    %1796 = vmatpush2.msra.mxu0 0.0
    %1797 = vmatprep.subr.mxu0 0.0
    %1798 = vmatpush2.msra.mxu0 0.0
    %1799 = vmatprep.subr.mxu0 0.0
    %1800 = vmatpush2.msra.mxu0 0.0
    %1801 = vmatprep.subr.mxu0 0.0
    %1802 = vmatpush2.msra.mxu0 0.0
    %1803 = vmatprep.subr.mxu0 0.0
    %1804 = vmatpush2.msra.mxu0 0.0
    %1805 = vmatprep.subr.mxu0 0.0
    %1806 = vmatpush2.msra.mxu0 0.0
    %1807 = vmatprep.subr.mxu0 0.0
    %1808 = vmatpush2.msra.mxu0 0.0
    %1809 = vmatprep.subr.mxu0 0.0
    %1810 = vmatpush2.msra.mxu0 0.0
    %1811 = vmatprep.subr.mxu0 0.0
    %1812 = vmatpush2.msra.mxu0 0.0
    %1813 = vmatprep.subr.mxu0 0.0
    %1814 = vmatpush2.msra.mxu0 0.0
    %1815 = vmatprep.subr.mxu0 0.0
    %1816 = vmatpush2.msra.mxu0 0.0
    %1817 = vmatprep.subr.mxu0 0.0
    %1818 = vmatpush2.msra.mxu0 0.0
    %1819 = vmatprep.subr.mxu0 0.0
    %1820 = vmatpush2.msra.mxu0 0.0
    %1821 = vmatprep.subr.mxu0 0.0
    %1822 = vmatpush2.msra.mxu0 0.0
    %1823 = vmatprep.mubr.f32.mxu0 0.0
    %1824 = vmatmul.mubr.f32.gmra.mxu0 %v1757
    %v1825 = vpop.f32.mrf.mxu0
    %v1826 = vadd.f32 %v1753, %v1825
    %v1827 = vpop.f32.mrf.mxu0
    %1828 = vdwg.mxu0
    %v1829 = vmax.f32 %v1826, 0.0
    %v1830 = vld [vmem:[%s7] sm:$0xff]
    %v1831 = vld [vmem:[%s7 + $0x8] sm:$0xff]
    %v1832 = vld [vmem:[%s7 + $0x10] sm:$0xff]
    %v1833 = vld [vmem:[%s7 + $0x18] sm:$0xff]
    %v1834 = vld [vmem:[%s8] sm:$0x1]
    %v1836 = vlaneseq
    %v1837 = vshrl.u32 %v1836, 7
    %v1838 = vsub.s32 0, %v1837
    %v1839 = vrot.slane %v1834, %v1838
    %v1842 = vsel %vm1755, %v1829, 0
    %1844 = vmatprep.subr.mxu0 0.0
    %1845 = vmatpush1.msra.mxu0 0.0
    %1846 = vmatprep.subr.mxu0 0.0
    %1847 = vmatpush1.msra.mxu0 0.0
    %1848 = vmatprep.subr.mxu0 0.0
    %1849 = vmatpush1.msra.mxu0 0.0
    %1850 = vmatprep.subr.mxu0 0.0
    %1851 = vmatpush1.msra.mxu0 0.0
    %1852 = vmatprep.subr.mxu0 0.0
    %1853 = vmatpush1.msra.mxu0 0.0
    %1854 = vmatprep.subr.mxu0 0.0
    %1855 = vmatpush1.msra.mxu0 0.0
    %1856 = vmatprep.subr.mxu0 0.0
    %1857 = vmatpush1.msra.mxu0 0.0
    %1858 = vmatprep.subr.mxu0 0.0
    %1859 = vmatpush1.msra.mxu0 0.0
    %1860 = vmatprep.subr.mxu0 0.0
    %1861 = vmatpush1.msra.mxu0 0.0
    %1862 = vmatprep.subr.mxu0 0.0
    %1863 = vmatpush1.msra.mxu0 0.0
    %1864 = vmatprep.subr.mxu0 0.0
    %1865 = vmatpush1.msra.mxu0 0.0
    %1866 = vmatprep.subr.mxu0 0.0
    %1867 = vmatpush1.msra.mxu0 0.0
    %1868 = vmatprep.subr.mxu0 0.0
    %1869 = vmatpush1.msra.mxu0 %v1833
    %1870 = vmatprep.subr.mxu0 0.0
    %1871 = vmatpush1.msra.mxu0 %v1832
    %1872 = vmatprep.subr.mxu0 0.0
    %1873 = vmatpush1.msra.mxu0 %v1831
    %1874 = vmatprep.subr.mxu0 0.0
    %1875 = vmatpush1.msra.mxu0 %v1830
    %1876 = vmatprep.subr.mxu0 0.0
    %1877 = vmatpush2.msra.mxu0 0.0
    %1878 = vmatprep.subr.mxu0 0.0
    %1879 = vmatpush2.msra.mxu0 0.0
    %1880 = vmatprep.subr.mxu0 0.0
    %1881 = vmatpush2.msra.mxu0 0.0
    %1882 = vmatprep.subr.mxu0 0.0
    %1883 = vmatpush2.msra.mxu0 0.0
    %1884 = vmatprep.subr.mxu0 0.0
    %1885 = vmatpush2.msra.mxu0 0.0
    %1886 = vmatprep.subr.mxu0 0.0
    %1887 = vmatpush2.msra.mxu0 0.0
    %1888 = vmatprep.subr.mxu0 0.0
    %1889 = vmatpush2.msra.mxu0 0.0
    %1890 = vmatprep.subr.mxu0 0.0
    %1891 = vmatpush2.msra.mxu0 0.0
    %1892 = vmatprep.subr.mxu0 0.0
    %1893 = vmatpush2.msra.mxu0 0.0
    %1894 = vmatprep.subr.mxu0 0.0
    %1895 = vmatpush2.msra.mxu0 0.0
    %1896 = vmatprep.subr.mxu0 0.0
    %1897 = vmatpush2.msra.mxu0 0.0
    %1898 = vmatprep.subr.mxu0 0.0
    %1899 = vmatpush2.msra.mxu0 0.0
    %1900 = vmatprep.subr.mxu0 0.0
    %1901 = vmatpush2.msra.mxu0 0.0
    %1902 = vmatprep.subr.mxu0 0.0
    %1903 = vmatpush2.msra.mxu0 0.0
    %1904 = vmatprep.subr.mxu0 0.0
    %1905 = vmatpush2.msra.mxu0 0.0
    %1906 = vmatprep.subr.mxu0 0.0
    %1907 = vmatpush2.msra.mxu0 0.0
    %1908 = vmatprep.mubr.f32.mxu0 0.0
    %1909 = vmatmul.mubr.f32.gmra.mxu0 %v1842
    %v1910 = vpop.f32.mrf.mxu0
    %v1911 = vadd.f32 %v1839, %v1910
    %v1912 = vpop.f32.mrf.mxu0
    %1913 = vdwg.mxu0
    %vm1914 = vcmask 9216
    %1915 = vst.msk [vmem:[#allocation3] sm:$0x3] %vm1914, %v1911
    // Predicated region
    $region38: #{baseline_net_forward.1} parent=1 // pred_check
      _
    $region39: #{baseline_net_forward.1} parent=1 // pred_check_branch
      %1917 = sbr.rel (0) target = $region41
    $region40: #{baseline_net_forward.1} parent=1 // pred_region
      %s1919 = ssub.s32 32, 32
      %1920 = vsyncadd [#allocation4], %s1919
      %s1922 = sshll.u32 [#allocation3], 4
      %s1923 = int_to_ptr.vmem [resolvable:$true] %s1922
      %1925 = dma.vmem_to_hbm [thread:$0]  %s1923, 32, %s9, [#allocation4]
    $region41: #{baseline_net_forward.1} parent=1 // pred_fallthru
      _
    // Predicated region
    $region42: #{baseline_net_forward.1} parent=1 // pred_check
      _
    $region43: #{baseline_net_forward.1} parent=1 // pred_check_branch
      %1927 = sbr.rel (0) target = $region45
    $region44: #{baseline_net_forward.1} parent=1 // pred_region
      %1928 = dma.done [#allocation4], 32
    $region45: #{baseline_net_forward.1} parent=1 // pred_fallthru
      _
    %1929 = vsyncpa [#allocation4], 1

</llo_original>
